<compile_context>
chip_gen: v5e
topology: v5e:2x2
jax: 0.10.0
libtpu: 0.0.40
codegen_flags: <defaults>
</compile_context>

<pallas_src>
import functools

import jax
import jax.numpy as jnp
from jax.experimental import pallas as pl
from jax.experimental.pallas import tpu as pltpu


# ----------------------------------------------------------------------------
# Pallas kernel: tc LSTM timesteps (recurrence only) + post-loop residual+LN.
# Grid = (batch tiles [parallel], time blocks [arbitrary, serial]).
# ----------------------------------------------------------------------------
def _plstm_kernel(x_ref, w_ref, b_ref, gamma_ref, beta_ref, out_ref,
                  h_sc, c_sc, hbuf):
    # Re-init recurrent state at the first time block of every batch tile.
    @pl.when(pl.program_id(1) == 0)
    def _():
        h_sc[...] = jnp.zeros_like(h_sc)
        c_sc[...] = jnp.zeros_like(c_sc)

    H = h_sc.shape[-1]
    tc = x_ref.shape[0]
    # Loop-invariant operands: constant index_map => DMA'd once, VMEM-resident.
    w = w_ref[...]            # (2H, 4H) bf16, gates packed [i, f, o, g]
    b = b_ref[...]            # (1, 4H) f32 (b_ih + b_hh)

    def step(s, carry):
        h = h_sc[...]                                    # (tb, H) f32
        c = c_sc[...]                                    # (tb, H) f32
        x_bf = x_ref[s]                                  # (tb, H) bf16
        # One bf16 MXU matmul per step with K = 2H, f32 accumulate:
        #   [x_t | h_{t-1}] @ [[W_ih]; [W_hh]]
        xh = jnp.concatenate([x_bf, h.astype(jnp.bfloat16)], axis=-1)
        pre = jnp.dot(xh, w, preferred_element_type=jnp.float32) + b
        sig = jax.nn.sigmoid(pre[:, : 3 * H])            # i | f | o in one pass
        g_g = jnp.tanh(pre[:, 3 * H:])
        i_g = sig[:, :H]
        f_g = sig[:, H: 2 * H]
        o_g = sig[:, 2 * H: 3 * H]
        c_new = f_g * c + i_g * g_g
        h_new = o_g * jnp.tanh(c_new)
        c_sc[...] = c_new
        h_sc[...] = h_new
        hbuf[s] = h_new                                  # LN deferred post-loop
        return carry

    # Partial unroll: LLO scheduling visibility without blowing vreg pressure.
    jax.lax.fori_loop(0, tc, step, 0, unroll=min(8, tc))

    # Residual + LayerNorm, vectorized over the whole (tc, tb, H) block,
    # written back as one large lane-dense store (off the serial chain).
    y = hbuf[...] + x_ref[...].astype(jnp.float32)
    mu = jnp.mean(y, axis=-1, keepdims=True)
    var = jnp.mean((y - mu) ** 2, axis=-1, keepdims=True)
    out_ref[...] = ((y - mu) * jax.lax.rsqrt(var + 1e-5) * gamma_ref[...]
                    + beta_ref[...]).astype(out_ref.dtype)


# ----------------------------------------------------------------------------
# jitted driver: fuse gate weights, stack [W_ih; W_hh], bf16-cast MXU operands,
# run the kernel.  Expects x_tm padded: T % tc == 0 and B % tb == 0.
# ----------------------------------------------------------------------------
@functools.partial(jax.jit, static_argnames=("tc", "tb"))
def _plstm_forward(x_tm, wih, whh, b, gamma, beta, *, tc, tb):
    T, B, H = x_tm.shape
    # PyTorch per-gate order (i, f, g, o)  ->  packed column order (i, f, o, g)
    order = (0, 1, 3, 2)
    wih_f = jnp.concatenate([wih[k] for k in order], axis=-1)       # (H, 4H)
    whh_f = jnp.concatenate([whh[k] for k in order], axis=-1)       # (H, 4H)
    w_full = jnp.concatenate([wih_f, whh_f], axis=0).astype(jnp.bfloat16)
    b_f = jnp.concatenate([b[k] for k in order], axis=-1)           # (1, 4H) f32
    x_bf = x_tm.astype(jnp.bfloat16)     # halve the x HBM stream into the kernel

    grid_spec = pltpu.PrefetchScalarGridSpec(
        num_scalar_prefetch=0,
        # Batch OUTER ("parallel" -> v7x second core), time INNER (serial).
        grid=(B // tb, T // tc),
        in_specs=[
            pl.BlockSpec((tc, tb, H), lambda bi, ti: (ti, bi, 0)),   # x (bf16)
            pl.BlockSpec((2 * H, 4 * H), lambda bi, ti: (0, 0)),     # [Wih;Whh]
            pl.BlockSpec((1, 4 * H), lambda bi, ti: (0, 0)),         # bias
            pl.BlockSpec((1, H), lambda bi, ti: (0, 0)),             # LN gamma
            pl.BlockSpec((1, H), lambda bi, ti: (0, 0)),             # LN beta
        ],
        out_specs=pl.BlockSpec((tc, tb, H), lambda bi, ti: (ti, bi, 0)),
        scratch_shapes=[pltpu.VMEM((tb, H), jnp.float32),            # h state
                        pltpu.VMEM((tb, H), jnp.float32),            # c state
                        pltpu.VMEM((tc, tb, H), jnp.float32)],       # h history
    )
    return pl.pallas_call(
        _plstm_kernel,
        out_shape=jax.ShapeDtypeStruct((T, B, H), jnp.bfloat16),
        grid_spec=grid_spec,
        compiler_params=pltpu.CompilerParams(
            dimension_semantics=("parallel", "arbitrary"),
            # Above the 16/32 MiB scoped defaults, below v7x's 64 MiB physical.
            vmem_limit_bytes=48 * 1024 * 1024),
    )(x_bf, w_full, b_f, gamma, beta)


# ----------------------------------------------------------------------------
# Parameter construction (PyTorch default shapes / init style, per-gate order
# i, f, g, o; the combined bias b = b_ih + b_hh).
# ----------------------------------------------------------------------------
def init_params(key, input_feature_dim):
    H = input_feature_dim                       # LSTM input == hidden == 2*D
    k = 1.0 / jnp.sqrt(jnp.float32(H))
    k_wih, k_whh, k_bih, k_bhh = jax.random.split(key, 4)
    wih = jax.random.uniform(k_wih, (4, H, H), jnp.float32, -k, k)
    whh = jax.random.uniform(k_whh, (4, H, H), jnp.float32, -k, k)
    b_ih = jax.random.uniform(k_bih, (4, 1, H), jnp.float32, -k, k)
    b_hh = jax.random.uniform(k_bhh, (4, 1, H), jnp.float32, -k, k)
    b = b_ih + b_hh
    gamma = jnp.ones((1, H), jnp.float32)       # LayerNorm defaults
    beta = jnp.zeros((1, H), jnp.float32)
    return dict(wih=wih, whh=whh, b=b, gamma=gamma, beta=beta)


# ----------------------------------------------------------------------------
# Module-level wrapper: pyramid reshape, build padded time-major buffer, pad
# time to tc and batch to the batch tile, run, un-pad & slice per sequence.
# ----------------------------------------------------------------------------
def plstm_layer_forward(input_x, params, time_chunk=64):
    """input_x: list of (T_i, D) arrays with even T_i.  Returns (out_list, None)."""
    D = int(input_x[0].shape[1])
    H = 2 * D
    lens = [int(x.shape[0]) // 2 for x in input_x]
    B = len(input_x)
    T_max = max(lens)

    tc = min(time_chunk, T_max)
    T_pad = -(-T_max // tc) * tc                  # round T up to multiple of tc
    tb = min(128, -(-B // 8) * 8)                 # batch tile: mult. of 8, <=128
    B_pad = -(-B // tb) * tb

    # pyramid reshape + pad; build (T_pad, B, H) time-major directly.
    cols = []
    for x, l in zip(input_x, lens):
        r = jnp.asarray(x, jnp.float32).reshape(l, H)
        cols.append(jnp.pad(r, ((0, T_pad - l), (0, 0))))
    x_tm = jnp.stack(cols, axis=1)                # (T_pad, B, H)
    if B_pad != B:
        x_tm = jnp.pad(x_tm, ((0, 0), (0, B_pad - B), (0, 0)))

    out_tm = _plstm_forward(x_tm, params["wih"], params["whh"], params["b"],
                            params["gamma"], params["beta"], tc=tc, tb=tb)

    # Slice per-sequence outputs straight from the time-major result
    # (cast back to f32 to preserve the reference module's output dtype).
    out_list = [out_tm[:l, i].astype(jnp.float32) for i, l in enumerate(lens)]
    # TODO(synk): PyTorch reference returns an undefined `hidden`; we return None.
    return out_list, None


# ----------------------------------------------------------------------------
# Pure-JAX f32 reference (lax.scan LSTM + residual + LayerNorm) for sanity check.
# ----------------------------------------------------------------------------
def _ref_lstm_norm(x_tm, wih, whh, b, gamma, beta):
    T, B, H = x_tm.shape

    def step(carry, x_t):
        h, c = carry
        pre = [x_t @ wih[k] + h @ whh[k] + b[k] for k in range(4)]
        i_g = jax.nn.sigmoid(pre[0])
        f_g = jax.nn.sigmoid(pre[1])
        g_g = jnp.tanh(pre[2])
        o_g = jax.nn.sigmoid(pre[3])
        c = f_g * c + i_g * g_g
        h = o_g * jnp.tanh(c)
        y = h + x_t
        mu = y.mean(-1, keepdims=True)
        var = ((y - mu) ** 2).mean(-1, keepdims=True)
        out = (y - mu) * jax.lax.rsqrt(var + 1e-5) * gamma + beta
        return (h, c), out

    init = (jnp.zeros((B, H), jnp.float32), jnp.zeros((B, H), jnp.float32))
    _, outs = jax.lax.scan(step, init, x_tm)
    return outs


if __name__ == "__main__":
    key = jax.random.PRNGKey(0)
    D = 64                     # raw per-frame feature dim
    H = 2 * D                  # module's input_feature_dim (= 128, lane-aligned)
    seq_lens = [16, 12, 8]     # even lengths (pyramid halves them)

    k_param, *k_seqs = jax.random.split(key, 1 + len(seq_lens))
    params = init_params(k_param, H)
    input_x = [jax.random.normal(k, (t, D), jnp.float32)
               for k, t in zip(k_seqs, seq_lens)]

    out_list, hidden = plstm_layer_forward(input_x, params)
    out_list = [jax.block_until_ready(o) for o in out_list]

    # sanity check against plain-JAX f32 reference (valid positions only);
    # tolerance loosened for bf16 MXU operands / bf16 x & output streams.
    B = len(input_x)
    lens = [t // 2 for t in seq_lens]
    T_max = max(lens)
    padded = jnp.zeros((B, T_max, H), jnp.float32)
    for i, x in enumerate(input_x):
        padded = padded.at[i, : lens[i]].set(x.reshape(lens[i], H))
    ref = jnp.transpose(
        _ref_lstm_norm(jnp.transpose(padded, (1, 0, 2)), params["wih"],
                       params["whh"], params["b"], params["gamma"],
                       params["beta"]),
        (1, 0, 2))
    for i, l in enumerate(lens):
        assert out_list[i].shape == (l, H)
        assert jnp.allclose(out_list[i], ref[i, :l], atol=5e-2, rtol=5e-2)

    print("KERNEL_OK")
</pallas_src>

<mosaic_0001>
module attributes {stable_mosaic.version = 11 : i64} {
  func.func @_plstm_kernel(%arg0: i32, %arg1: i32, %arg2: memref<8x8x128xbf16, #tpu.memory_space<vmem>>, %arg3: memref<256x512xbf16, #tpu.memory_space<vmem>>, %arg4: memref<1x512xf32, #tpu.memory_space<vmem>>, %arg5: memref<1x128xf32, #tpu.memory_space<vmem>>, %arg6: memref<1x128xf32, #tpu.memory_space<vmem>>, %arg7: memref<8x8x128xbf16, #tpu.memory_space<vmem>>, %arg8: memref<8x128xf32, #tpu.memory_space<vmem>>, %arg9: memref<8x128xf32, #tpu.memory_space<vmem>>, %arg10: memref<8x8x128xf32, #tpu.memory_space<vmem>>) attributes {dimension_semantics = [#tpu.dimension_semantics<parallel>, #tpu.dimension_semantics<arbitrary>], iteration_bounds = array<i64: 1, 1>, scalar_prefetch = 0 : i64, scratch_operands = 3 : i64, tpu.core_type = #tpu.core_type<tc>, window_params = [{transform_indices = @transform_0, window_bounds = array<i64: 8, 8, 128>}, {pipeline_mode = #tpu.pipeline_mode<synchronous>, transform_indices = @transform_1, window_bounds = array<i64: 256, 512>}, {pipeline_mode = #tpu.pipeline_mode<synchronous>, transform_indices = @transform_2, window_bounds = array<i64: 1, 512>}, {pipeline_mode = #tpu.pipeline_mode<synchronous>, transform_indices = @transform_3, window_bounds = array<i64: 1, 128>}, {pipeline_mode = #tpu.pipeline_mode<synchronous>, transform_indices = @transform_4, window_bounds = array<i64: 1, 128>}, {transform_indices = @transform_5, window_bounds = array<i64: 8, 8, 128>}]} {
    %c0_i32 = arith.constant 0 : i32
    %0 = arith.cmpi eq, %arg1, %c0_i32 : i32
    %1 = arith.extui %0 : i1 to i32
    %c0_i32_0 = arith.constant 0 : i32
    %2 = arith.cmpi ne, %1, %c0_i32_0 : i32
    scf.if %2 {
      %cst_134 = arith.constant 0.000000e+00 : f32
      %293 = vector.broadcast %cst_134 : f32 to vector<8x128xf32>
      %c0_135 = arith.constant 0 : index
      %c0_136 = arith.constant 0 : index
      %294 = vector.load %arg8[%c0_135, %c0_136] : memref<8x128xf32, #tpu.memory_space<vmem>>, vector<8x128xf32>
      tpu.vector_store %arg8[%c0_135, %c0_136], %293 {strides = array<i32>} : memref<8x128xf32, #tpu.memory_space<vmem>>, vector<8x128xf32>,
      %cst_137 = arith.constant 0.000000e+00 : f32
      %295 = vector.broadcast %cst_137 : f32 to vector<8x128xf32>
      %c0_138 = arith.constant 0 : index
      %c0_139 = arith.constant 0 : index
      %296 = vector.load %arg9[%c0_138, %c0_139] : memref<8x128xf32, #tpu.memory_space<vmem>>, vector<8x128xf32>
      tpu.vector_store %arg9[%c0_138, %c0_139], %295 {strides = array<i32>} : memref<8x128xf32, #tpu.memory_space<vmem>>, vector<8x128xf32>,
    } else {
    }
    %c0 = arith.constant 0 : index
    %c0_1 = arith.constant 0 : index
    %3 = vector.load %arg3[%c0, %c0_1] : memref<256x512xbf16, #tpu.memory_space<vmem>>, vector<256x512xbf16>
    %c0_2 = arith.constant 0 : index
    %c0_3 = arith.constant 0 : index
    %4 = vector.load %arg4[%c0_2, %c0_3] : memref<1x512xf32, #tpu.memory_space<vmem>>, vector<1x512xf32>
    %c0_i32_4 = arith.constant 0 : i32
    %c0_5 = arith.constant 0 : index
    %c0_6 = arith.constant 0 : index
    %5 = vector.load %arg8[%c0_5, %c0_6] : memref<8x128xf32, #tpu.memory_space<vmem>>, vector<8x128xf32>
    %c0_7 = arith.constant 0 : index
    %c0_8 = arith.constant 0 : index
    %6 = vector.load %arg9[%c0_7, %c0_8] : memref<8x128xf32, #tpu.memory_space<vmem>>, vector<8x128xf32>
    %7 = arith.index_cast %c0_i32_4 : i32 to index
    %c0_9 = arith.constant 0 : index
    %c0_10 = arith.constant 0 : index
    %8 = vector.load %arg2[%7, %c0_9, %c0_10] : memref<8x8x128xbf16, #tpu.memory_space<vmem>>, vector<1x8x128xbf16>
    %9 = vector.shape_cast %8 : vector<1x8x128xbf16> to vector<8x128xbf16>
    %10 = arith.truncf %5 : vector<8x128xf32> to vector<8x128xbf16>
    %11 = tpu.concatenate %9, %10 in 1 : vector<8x128xbf16>, vector<8x128xbf16> -> vector<8x256xbf16>
    %cst = arith.constant dense<0.000000e+00> : vector<8x512xf32>
    %12 = tpu.matmul %11, %3, %cst {dimension_numbers = #tpu.dot_dimension_numbers<[1], [0], [0], [1], [0, 0, 1, 1], [], []>} : vector<8x256xbf16>, vector<256x512xbf16>, vector<8x512xf32> -> vector<8x512xf32>
    %13 = vector.broadcast %4 : vector<1x512xf32> to vector<8x512xf32>
    %14 = arith.addf %12, %13 : vector<8x512xf32>
    %15 = vector.extract_strided_slice %14 {offsets = [0, 0], sizes = [8, 384], strides = [1, 1]} : vector<8x512xf32> to vector<8x384xf32>
    %16 = arith.negf %15 : vector<8x384xf32>
    %17 = math.exp %16 : vector<8x384xf32>
    %cst_11 = arith.constant 1.000000e+00 : f32
    %18 = vector.broadcast %cst_11 : f32 to vector<8x384xf32>
    %19 = arith.addf %18, %17 : vector<8x384xf32>
    %20 = arith.divf %18, %19 : vector<8x384xf32>
    %21 = vector.extract_strided_slice %14 {offsets = [0, 384], sizes = [8, 128], strides = [1, 1]} : vector<8x512xf32> to vector<8x128xf32>
    %22 = math.tanh %21 : vector<8x128xf32>
    %23 = vector.extract_strided_slice %20 {offsets = [0, 0], sizes = [8, 128], strides = [1, 1]} : vector<8x384xf32> to vector<8x128xf32>
    %24 = vector.extract_strided_slice %20 {offsets = [0, 128], sizes = [8, 128], strides = [1, 1]} : vector<8x384xf32> to vector<8x128xf32>
    %25 = vector.extract_strided_slice %20 {offsets = [0, 256], sizes = [8, 128], strides = [1, 1]} : vector<8x384xf32> to vector<8x128xf32>
    %26 = arith.mulf %24, %6 : vector<8x128xf32>
    %27 = arith.mulf %23, %22 : vector<8x128xf32>
    %28 = arith.addf %26, %27 : vector<8x128xf32>
    %29 = math.tanh %28 : vector<8x128xf32>
    %30 = arith.mulf %25, %29 : vector<8x128xf32>
    %c0_12 = arith.constant 0 : index
    %c0_13 = arith.constant 0 : index
    %31 = vector.load %arg9[%c0_12, %c0_13] : memref<8x128xf32, #tpu.memory_space<vmem>>, vector<8x128xf32>
    tpu.vector_store %arg9[%c0_12, %c0_13], %28 {strides = array<i32>} : memref<8x128xf32, #tpu.memory_space<vmem>>, vector<8x128xf32>,
    %c0_14 = arith.constant 0 : index
    %c0_15 = arith.constant 0 : index
    %32 = vector.load %arg8[%c0_14, %c0_15] : memref<8x128xf32, #tpu.memory_space<vmem>>, vector<8x128xf32>
    tpu.vector_store %arg8[%c0_14, %c0_15], %30 {strides = array<i32>} : memref<8x128xf32, #tpu.memory_space<vmem>>, vector<8x128xf32>,
    %33 = arith.index_cast %c0_i32_4 : i32 to index
    %c0_16 = arith.constant 0 : index
    %c0_17 = arith.constant 0 : index
    %34 = vector.load %arg10[%33, %c0_16, %c0_17] : memref<8x8x128xf32, #tpu.memory_space<vmem>>, vector<1x8x128xf32>
    %35 = vector.shape_cast %34 : vector<1x8x128xf32> to vector<8x128xf32>
    %36 = vector.shape_cast %30 : vector<8x128xf32> to vector<1x8x128xf32>
    tpu.vector_store %arg10[%33, %c0_16, %c0_17], %36 {strides = array<i32>} : memref<8x8x128xf32, #tpu.memory_space<vmem>>, vector<1x8x128xf32>,
    %c1_i32 = arith.constant 1 : i32
    %c0_18 = arith.constant 0 : index
    %c0_19 = arith.constant 0 : index
    %37 = vector.load %arg8[%c0_18, %c0_19] : memref<8x128xf32, #tpu.memory_space<vmem>>, vector<8x128xf32>
    %c0_20 = arith.constant 0 : index
    %c0_21 = arith.constant 0 : index
    %38 = vector.load %arg9[%c0_20, %c0_21] : memref<8x128xf32, #tpu.memory_space<vmem>>, vector<8x128xf32>
    %39 = arith.index_cast %c1_i32 : i32 to index
    %c0_22 = arith.constant 0 : index
    %c0_23 = arith.constant 0 : index
    %40 = vector.load %arg2[%39, %c0_22, %c0_23] : memref<8x8x128xbf16, #tpu.memory_space<vmem>>, vector<1x8x128xbf16>
    %41 = vector.shape_cast %40 : vector<1x8x128xbf16> to vector<8x128xbf16>
    %42 = arith.truncf %37 : vector<8x128xf32> to vector<8x128xbf16>
    %43 = tpu.concatenate %41, %42 in 1 : vector<8x128xbf16>, vector<8x128xbf16> -> vector<8x256xbf16>
    %cst_24 = arith.constant dense<0.000000e+00> : vector<8x512xf32>
    %44 = tpu.matmul %43, %3, %cst_24 {dimension_numbers = #tpu.dot_dimension_numbers<[1], [0], [0], [1], [0, 0, 1, 1], [], []>} : vector<8x256xbf16>, vector<256x512xbf16>, vector<8x512xf32> -> vector<8x512xf32>
    %45 = vector.broadcast %4 : vector<1x512xf32> to vector<8x512xf32>
    %46 = arith.addf %44, %45 : vector<8x512xf32>
    %47 = vector.extract_strided_slice %46 {offsets = [0, 0], sizes = [8, 384], strides = [1, 1]} : vector<8x512xf32> to vector<8x384xf32>
    %48 = arith.negf %47 : vector<8x384xf32>
    %49 = math.exp %48 : vector<8x384xf32>
    %cst_25 = arith.constant 1.000000e+00 : f32
    %50 = vector.broadcast %cst_25 : f32 to vector<8x384xf32>
    %51 = arith.addf %50, %49 : vector<8x384xf32>
    %52 = arith.divf %50, %51 : vector<8x384xf32>
    %53 = vector.extract_strided_slice %46 {offsets = [0, 384], sizes = [8, 128], strides = [1, 1]} : vector<8x512xf32> to vector<8x128xf32>
    %54 = math.tanh %53 : vector<8x128xf32>
    %55 = vector.extract_strided_slice %52 {offsets = [0, 0], sizes = [8, 128], strides = [1, 1]} : vector<8x384xf32> to vector<8x128xf32>
    %56 = vector.extract_strided_slice %52 {offsets = [0, 128], sizes = [8, 128], strides = [1, 1]} : vector<8x384xf32> to vector<8x128xf32>
    %57 = vector.extract_strided_slice %52 {offsets = [0, 256], sizes = [8, 128], strides = [1, 1]} : vector<8x384xf32> to vector<8x128xf32>
    %58 = arith.mulf %56, %38 : vector<8x128xf32>
    %59 = arith.mulf %55, %54 : vector<8x128xf32>
    %60 = arith.addf %58, %59 : vector<8x128xf32>
    %61 = math.tanh %60 : vector<8x128xf32>
    %62 = arith.mulf %57, %61 : vector<8x128xf32>
    %c0_26 = arith.constant 0 : index
    %c0_27 = arith.constant 0 : index
    %63 = vector.load %arg9[%c0_26, %c0_27] : memref<8x128xf32, #tpu.memory_space<vmem>>, vector<8x128xf32>
    tpu.vector_store %arg9[%c0_26, %c0_27], %60 {strides = array<i32>} : memref<8x128xf32, #tpu.memory_space<vmem>>, vector<8x128xf32>,
    %c0_28 = arith.constant 0 : index
    %c0_29 = arith.constant 0 : index
    %64 = vector.load %arg8[%c0_28, %c0_29] : memref<8x128xf32, #tpu.memory_space<vmem>>, vector<8x128xf32>
    tpu.vector_store %arg8[%c0_28, %c0_29], %62 {strides = array<i32>} : memref<8x128xf32, #tpu.memory_space<vmem>>, vector<8x128xf32>,
    %65 = arith.index_cast %c1_i32 : i32 to index
    %c0_30 = arith.constant 0 : index
    %c0_31 = arith.constant 0 : index
    %66 = vector.load %arg10[%65, %c0_30, %c0_31] : memref<8x8x128xf32, #tpu.memory_space<vmem>>, vector<1x8x128xf32>
    %67 = vector.shape_cast %66 : vector<1x8x128xf32> to vector<8x128xf32>
    %68 = vector.shape_cast %62 : vector<8x128xf32> to vector<1x8x128xf32>
    tpu.vector_store %arg10[%65, %c0_30, %c0_31], %68 {strides = array<i32>} : memref<8x8x128xf32, #tpu.memory_space<vmem>>, vector<1x8x128xf32>,
    %c2_i32 = arith.constant 2 : i32
    %c0_32 = arith.constant 0 : index
    %c0_33 = arith.constant 0 : index
    %69 = vector.load %arg8[%c0_32, %c0_33] : memref<8x128xf32, #tpu.memory_space<vmem>>, vector<8x128xf32>
    %c0_34 = arith.constant 0 : index
    %c0_35 = arith.constant 0 : index
    %70 = vector.load %arg9[%c0_34, %c0_35] : memref<8x128xf32, #tpu.memory_space<vmem>>, vector<8x128xf32>
    %71 = arith.index_cast %c2_i32 : i32 to index
    %c0_36 = arith.constant 0 : index
    %c0_37 = arith.constant 0 : index
    %72 = vector.load %arg2[%71, %c0_36, %c0_37] : memref<8x8x128xbf16, #tpu.memory_space<vmem>>, vector<1x8x128xbf16>
    %73 = vector.shape_cast %72 : vector<1x8x128xbf16> to vector<8x128xbf16>
    %74 = arith.truncf %69 : vector<8x128xf32> to vector<8x128xbf16>
    %75 = tpu.concatenate %73, %74 in 1 : vector<8x128xbf16>, vector<8x128xbf16> -> vector<8x256xbf16>
    %cst_38 = arith.constant dense<0.000000e+00> : vector<8x512xf32>
    %76 = tpu.matmul %75, %3, %cst_38 {dimension_numbers = #tpu.dot_dimension_numbers<[1], [0], [0], [1], [0, 0, 1, 1], [], []>} : vector<8x256xbf16>, vector<256x512xbf16>, vector<8x512xf32> -> vector<8x512xf32>
    %77 = vector.broadcast %4 : vector<1x512xf32> to vector<8x512xf32>
    %78 = arith.addf %76, %77 : vector<8x512xf32>
    %79 = vector.extract_strided_slice %78 {offsets = [0, 0], sizes = [8, 384], strides = [1, 1]} : vector<8x512xf32> to vector<8x384xf32>
    %80 = arith.negf %79 : vector<8x384xf32>
    %81 = math.exp %80 : vector<8x384xf32>
    %cst_39 = arith.constant 1.000000e+00 : f32
    %82 = vector.broadcast %cst_39 : f32 to vector<8x384xf32>
    %83 = arith.addf %82, %81 : vector<8x384xf32>
    %84 = arith.divf %82, %83 : vector<8x384xf32>
    %85 = vector.extract_strided_slice %78 {offsets = [0, 384], sizes = [8, 128], strides = [1, 1]} : vector<8x512xf32> to vector<8x128xf32>
    %86 = math.tanh %85 : vector<8x128xf32>
    %87 = vector.extract_strided_slice %84 {offsets = [0, 0], sizes = [8, 128], strides = [1, 1]} : vector<8x384xf32> to vector<8x128xf32>
    %88 = vector.extract_strided_slice %84 {offsets = [0, 128], sizes = [8, 128], strides = [1, 1]} : vector<8x384xf32> to vector<8x128xf32>
    %89 = vector.extract_strided_slice %84 {offsets = [0, 256], sizes = [8, 128], strides = [1, 1]} : vector<8x384xf32> to vector<8x128xf32>
    %90 = arith.mulf %88, %70 : vector<8x128xf32>
    %91 = arith.mulf %87, %86 : vector<8x128xf32>
    %92 = arith.addf %90, %91 : vector<8x128xf32>
    %93 = math.tanh %92 : vector<8x128xf32>
    %94 = arith.mulf %89, %93 : vector<8x128xf32>
    %c0_40 = arith.constant 0 : index
    %c0_41 = arith.constant 0 : index
    %95 = vector.load %arg9[%c0_40, %c0_41] : memref<8x128xf32, #tpu.memory_space<vmem>>, vector<8x128xf32>
    tpu.vector_store %arg9[%c0_40, %c0_41], %92 {strides = array<i32>} : memref<8x128xf32, #tpu.memory_space<vmem>>, vector<8x128xf32>,
    %c0_42 = arith.constant 0 : index
    %c0_43 = arith.constant 0 : index
    %96 = vector.load %arg8[%c0_42, %c0_43] : memref<8x128xf32, #tpu.memory_space<vmem>>, vector<8x128xf32>
    tpu.vector_store %arg8[%c0_42, %c0_43], %94 {strides = array<i32>} : memref<8x128xf32, #tpu.memory_space<vmem>>, vector<8x128xf32>,
    %97 = arith.index_cast %c2_i32 : i32 to index
    %c0_44 = arith.constant 0 : index
    %c0_45 = arith.constant 0 : index
    %98 = vector.load %arg10[%97, %c0_44, %c0_45] : memref<8x8x128xf32, #tpu.memory_space<vmem>>, vector<1x8x128xf32>
    %99 = vector.shape_cast %98 : vector<1x8x128xf32> to vector<8x128xf32>
    %100 = vector.shape_cast %94 : vector<8x128xf32> to vector<1x8x128xf32>
    tpu.vector_store %arg10[%97, %c0_44, %c0_45], %100 {strides = array<i32>} : memref<8x8x128xf32, #tpu.memory_space<vmem>>, vector<1x8x128xf32>,
    %c3_i32 = arith.constant 3 : i32
    %c0_46 = arith.constant 0 : index
    %c0_47 = arith.constant 0 : index
    %101 = vector.load %arg8[%c0_46, %c0_47] : memref<8x128xf32, #tpu.memory_space<vmem>>, vector<8x128xf32>
    %c0_48 = arith.constant 0 : index
    %c0_49 = arith.constant 0 : index
    %102 = vector.load %arg9[%c0_48, %c0_49] : memref<8x128xf32, #tpu.memory_space<vmem>>, vector<8x128xf32>
    %103 = arith.index_cast %c3_i32 : i32 to index
    %c0_50 = arith.constant 0 : index
    %c0_51 = arith.constant 0 : index
    %104 = vector.load %arg2[%103, %c0_50, %c0_51] : memref<8x8x128xbf16, #tpu.memory_space<vmem>>, vector<1x8x128xbf16>
    %105 = vector.shape_cast %104 : vector<1x8x128xbf16> to vector<8x128xbf16>
    %106 = arith.truncf %101 : vector<8x128xf32> to vector<8x128xbf16>
    %107 = tpu.concatenate %105, %106 in 1 : vector<8x128xbf16>, vector<8x128xbf16> -> vector<8x256xbf16>
    %cst_52 = arith.constant dense<0.000000e+00> : vector<8x512xf32>
    %108 = tpu.matmul %107, %3, %cst_52 {dimension_numbers = #tpu.dot_dimension_numbers<[1], [0], [0], [1], [0, 0, 1, 1], [], []>} : vector<8x256xbf16>, vector<256x512xbf16>, vector<8x512xf32> -> vector<8x512xf32>
    %109 = vector.broadcast %4 : vector<1x512xf32> to vector<8x512xf32>
    %110 = arith.addf %108, %109 : vector<8x512xf32>
    %111 = vector.extract_strided_slice %110 {offsets = [0, 0], sizes = [8, 384], strides = [1, 1]} : vector<8x512xf32> to vector<8x384xf32>
    %112 = arith.negf %111 : vector<8x384xf32>
    %113 = math.exp %112 : vector<8x384xf32>
    %cst_53 = arith.constant 1.000000e+00 : f32
    %114 = vector.broadcast %cst_53 : f32 to vector<8x384xf32>
    %115 = arith.addf %114, %113 : vector<8x384xf32>
    %116 = arith.divf %114, %115 : vector<8x384xf32>
    %117 = vector.extract_strided_slice %110 {offsets = [0, 384], sizes = [8, 128], strides = [1, 1]} : vector<8x512xf32> to vector<8x128xf32>
    %118 = math.tanh %117 : vector<8x128xf32>
    %119 = vector.extract_strided_slice %116 {offsets = [0, 0], sizes = [8, 128], strides = [1, 1]} : vector<8x384xf32> to vector<8x128xf32>
    %120 = vector.extract_strided_slice %116 {offsets = [0, 128], sizes = [8, 128], strides = [1, 1]} : vector<8x384xf32> to vector<8x128xf32>
    %121 = vector.extract_strided_slice %116 {offsets = [0, 256], sizes = [8, 128], strides = [1, 1]} : vector<8x384xf32> to vector<8x128xf32>
    %122 = arith.mulf %120, %102 : vector<8x128xf32>
    %123 = arith.mulf %119, %118 : vector<8x128xf32>
    %124 = arith.addf %122, %123 : vector<8x128xf32>
    %125 = math.tanh %124 : vector<8x128xf32>
    %126 = arith.mulf %121, %125 : vector<8x128xf32>
    %c0_54 = arith.constant 0 : index
    %c0_55 = arith.constant 0 : index
    %127 = vector.load %arg9[%c0_54, %c0_55] : memref<8x128xf32, #tpu.memory_space<vmem>>, vector<8x128xf32>
    tpu.vector_store %arg9[%c0_54, %c0_55], %124 {strides = array<i32>} : memref<8x128xf32, #tpu.memory_space<vmem>>, vector<8x128xf32>,
    %c0_56 = arith.constant 0 : index
    %c0_57 = arith.constant 0 : index
    %128 = vector.load %arg8[%c0_56, %c0_57] : memref<8x128xf32, #tpu.memory_space<vmem>>, vector<8x128xf32>
    tpu.vector_store %arg8[%c0_56, %c0_57], %126 {strides = array<i32>} : memref<8x128xf32, #tpu.memory_space<vmem>>, vector<8x128xf32>,
    %129 = arith.index_cast %c3_i32 : i32 to index
    %c0_58 = arith.constant 0 : index
    %c0_59 = arith.constant 0 : index
    %130 = vector.load %arg10[%129, %c0_58, %c0_59] : memref<8x8x128xf32, #tpu.memory_space<vmem>>, vector<1x8x128xf32>
    %131 = vector.shape_cast %130 : vector<1x8x128xf32> to vector<8x128xf32>
    %132 = vector.shape_cast %126 : vector<8x128xf32> to vector<1x8x128xf32>
    tpu.vector_store %arg10[%129, %c0_58, %c0_59], %132 {strides = array<i32>} : memref<8x8x128xf32, #tpu.memory_space<vmem>>, vector<1x8x128xf32>,
    %c4_i32 = arith.constant 4 : i32
    %c0_60 = arith.constant 0 : index
    %c0_61 = arith.constant 0 : index
    %133 = vector.load %arg8[%c0_60, %c0_61] : memref<8x128xf32, #tpu.memory_space<vmem>>, vector<8x128xf32>
    %c0_62 = arith.constant 0 : index
    %c0_63 = arith.constant 0 : index
    %134 = vector.load %arg9[%c0_62, %c0_63] : memref<8x128xf32, #tpu.memory_space<vmem>>, vector<8x128xf32>
    %135 = arith.index_cast %c4_i32 : i32 to index
    %c0_64 = arith.constant 0 : index
    %c0_65 = arith.constant 0 : index
    %136 = vector.load %arg2[%135, %c0_64, %c0_65] : memref<8x8x128xbf16, #tpu.memory_space<vmem>>, vector<1x8x128xbf16>
    %137 = vector.shape_cast %136 : vector<1x8x128xbf16> to vector<8x128xbf16>
    %138 = arith.truncf %133 : vector<8x128xf32> to vector<8x128xbf16>
    %139 = tpu.concatenate %137, %138 in 1 : vector<8x128xbf16>, vector<8x128xbf16> -> vector<8x256xbf16>
    %cst_66 = arith.constant dense<0.000000e+00> : vector<8x512xf32>
    %140 = tpu.matmul %139, %3, %cst_66 {dimension_numbers = #tpu.dot_dimension_numbers<[1], [0], [0], [1], [0, 0, 1, 1], [], []>} : vector<8x256xbf16>, vector<256x512xbf16>, vector<8x512xf32> -> vector<8x512xf32>
    %141 = vector.broadcast %4 : vector<1x512xf32> to vector<8x512xf32>
    %142 = arith.addf %140, %141 : vector<8x512xf32>
    %143 = vector.extract_strided_slice %142 {offsets = [0, 0], sizes = [8, 384], strides = [1, 1]} : vector<8x512xf32> to vector<8x384xf32>
    %144 = arith.negf %143 : vector<8x384xf32>
    %145 = math.exp %144 : vector<8x384xf32>
    %cst_67 = arith.constant 1.000000e+00 : f32
    %146 = vector.broadcast %cst_67 : f32 to vector<8x384xf32>
    %147 = arith.addf %146, %145 : vector<8x384xf32>
    %148 = arith.divf %146, %147 : vector<8x384xf32>
    %149 = vector.extract_strided_slice %142 {offsets = [0, 384], sizes = [8, 128], strides = [1, 1]} : vector<8x512xf32> to vector<8x128xf32>
    %150 = math.tanh %149 : vector<8x128xf32>
    %151 = vector.extract_strided_slice %148 {offsets = [0, 0], sizes = [8, 128], strides = [1, 1]} : vector<8x384xf32> to vector<8x128xf32>
    %152 = vector.extract_strided_slice %148 {offsets = [0, 128], sizes = [8, 128], strides = [1, 1]} : vector<8x384xf32> to vector<8x128xf32>
    %153 = vector.extract_strided_slice %148 {offsets = [0, 256], sizes = [8, 128], strides = [1, 1]} : vector<8x384xf32> to vector<8x128xf32>
    %154 = arith.mulf %152, %134 : vector<8x128xf32>
    %155 = arith.mulf %151, %150 : vector<8x128xf32>
    %156 = arith.addf %154, %155 : vector<8x128xf32>
    %157 = math.tanh %156 : vector<8x128xf32>
    %158 = arith.mulf %153, %157 : vector<8x128xf32>
    %c0_68 = arith.constant 0 : index
    %c0_69 = arith.constant 0 : index
    %159 = vector.load %arg9[%c0_68, %c0_69] : memref<8x128xf32, #tpu.memory_space<vmem>>, vector<8x128xf32>
    tpu.vector_store %arg9[%c0_68, %c0_69], %156 {strides = array<i32>} : memref<8x128xf32, #tpu.memory_space<vmem>>, vector<8x128xf32>,
    %c0_70 = arith.constant 0 : index
    %c0_71 = arith.constant 0 : index
    %160 = vector.load %arg8[%c0_70, %c0_71] : memref<8x128xf32, #tpu.memory_space<vmem>>, vector<8x128xf32>
    tpu.vector_store %arg8[%c0_70, %c0_71], %158 {strides = array<i32>} : memref<8x128xf32, #tpu.memory_space<vmem>>, vector<8x128xf32>,
    %161 = arith.index_cast %c4_i32 : i32 to index
    %c0_72 = arith.constant 0 : index
    %c0_73 = arith.constant 0 : index
    %162 = vector.load %arg10[%161, %c0_72, %c0_73] : memref<8x8x128xf32, #tpu.memory_space<vmem>>, vector<1x8x128xf32>
    %163 = vector.shape_cast %162 : vector<1x8x128xf32> to vector<8x128xf32>
    %164 = vector.shape_cast %158 : vector<8x128xf32> to vector<1x8x128xf32>
    tpu.vector_store %arg10[%161, %c0_72, %c0_73], %164 {strides = array<i32>} : memref<8x8x128xf32, #tpu.memory_space<vmem>>, vector<1x8x128xf32>,
    %c5_i32 = arith.constant 5 : i32
    %c0_74 = arith.constant 0 : index
    %c0_75 = arith.constant 0 : index
    %165 = vector.load %arg8[%c0_74, %c0_75] : memref<8x128xf32, #tpu.memory_space<vmem>>, vector<8x128xf32>
    %c0_76 = arith.constant 0 : index
    %c0_77 = arith.constant 0 : index
    %166 = vector.load %arg9[%c0_76, %c0_77] : memref<8x128xf32, #tpu.memory_space<vmem>>, vector<8x128xf32>
    %167 = arith.index_cast %c5_i32 : i32 to index
    %c0_78 = arith.constant 0 : index
    %c0_79 = arith.constant 0 : index
    %168 = vector.load %arg2[%167, %c0_78, %c0_79] : memref<8x8x128xbf16, #tpu.memory_space<vmem>>, vector<1x8x128xbf16>
    %169 = vector.shape_cast %168 : vector<1x8x128xbf16> to vector<8x128xbf16>
    %170 = arith.truncf %165 : vector<8x128xf32> to vector<8x128xbf16>
    %171 = tpu.concatenate %169, %170 in 1 : vector<8x128xbf16>, vector<8x128xbf16> -> vector<8x256xbf16>
    %cst_80 = arith.constant dense<0.000000e+00> : vector<8x512xf32>
    %172 = tpu.matmul %171, %3, %cst_80 {dimension_numbers = #tpu.dot_dimension_numbers<[1], [0], [0], [1], [0, 0, 1, 1], [], []>} : vector<8x256xbf16>, vector<256x512xbf16>, vector<8x512xf32> -> vector<8x512xf32>
    %173 = vector.broadcast %4 : vector<1x512xf32> to vector<8x512xf32>
    %174 = arith.addf %172, %173 : vector<8x512xf32>
    %175 = vector.extract_strided_slice %174 {offsets = [0, 0], sizes = [8, 384], strides = [1, 1]} : vector<8x512xf32> to vector<8x384xf32>
    %176 = arith.negf %175 : vector<8x384xf32>
    %177 = math.exp %176 : vector<8x384xf32>
    %cst_81 = arith.constant 1.000000e+00 : f32
    %178 = vector.broadcast %cst_81 : f32 to vector<8x384xf32>
    %179 = arith.addf %178, %177 : vector<8x384xf32>
    %180 = arith.divf %178, %179 : vector<8x384xf32>
    %181 = vector.extract_strided_slice %174 {offsets = [0, 384], sizes = [8, 128], strides = [1, 1]} : vector<8x512xf32> to vector<8x128xf32>
    %182 = math.tanh %181 : vector<8x128xf32>
    %183 = vector.extract_strided_slice %180 {offsets = [0, 0], sizes = [8, 128], strides = [1, 1]} : vector<8x384xf32> to vector<8x128xf32>
    %184 = vector.extract_strided_slice %180 {offsets = [0, 128], sizes = [8, 128], strides = [1, 1]} : vector<8x384xf32> to vector<8x128xf32>
    %185 = vector.extract_strided_slice %180 {offsets = [0, 256], sizes = [8, 128], strides = [1, 1]} : vector<8x384xf32> to vector<8x128xf32>
    %186 = arith.mulf %184, %166 : vector<8x128xf32>
    %187 = arith.mulf %183, %182 : vector<8x128xf32>
    %188 = arith.addf %186, %187 : vector<8x128xf32>
    %189 = math.tanh %188 : vector<8x128xf32>
    %190 = arith.mulf %185, %189 : vector<8x128xf32>
    %c0_82 = arith.constant 0 : index
    %c0_83 = arith.constant 0 : index
    %191 = vector.load %arg9[%c0_82, %c0_83] : memref<8x128xf32, #tpu.memory_space<vmem>>, vector<8x128xf32>
    tpu.vector_store %arg9[%c0_82, %c0_83], %188 {strides = array<i32>} : memref<8x128xf32, #tpu.memory_space<vmem>>, vector<8x128xf32>,
    %c0_84 = arith.constant 0 : index
    %c0_85 = arith.constant 0 : index
    %192 = vector.load %arg8[%c0_84, %c0_85] : memref<8x128xf32, #tpu.memory_space<vmem>>, vector<8x128xf32>
    tpu.vector_store %arg8[%c0_84, %c0_85], %190 {strides = array<i32>} : memref<8x128xf32, #tpu.memory_space<vmem>>, vector<8x128xf32>,
    %193 = arith.index_cast %c5_i32 : i32 to index
    %c0_86 = arith.constant 0 : index
    %c0_87 = arith.constant 0 : index
    %194 = vector.load %arg10[%193, %c0_86, %c0_87] : memref<8x8x128xf32, #tpu.memory_space<vmem>>, vector<1x8x128xf32>
    %195 = vector.shape_cast %194 : vector<1x8x128xf32> to vector<8x128xf32>
    %196 = vector.shape_cast %190 : vector<8x128xf32> to vector<1x8x128xf32>
    tpu.vector_store %arg10[%193, %c0_86, %c0_87], %196 {strides = array<i32>} : memref<8x8x128xf32, #tpu.memory_space<vmem>>, vector<1x8x128xf32>,
    %c6_i32 = arith.constant 6 : i32
    %c0_88 = arith.constant 0 : index
    %c0_89 = arith.constant 0 : index
    %197 = vector.load %arg8[%c0_88, %c0_89] : memref<8x128xf32, #tpu.memory_space<vmem>>, vector<8x128xf32>
    %c0_90 = arith.constant 0 : index
    %c0_91 = arith.constant 0 : index
    %198 = vector.load %arg9[%c0_90, %c0_91] : memref<8x128xf32, #tpu.memory_space<vmem>>, vector<8x128xf32>
    %199 = arith.index_cast %c6_i32 : i32 to index
    %c0_92 = arith.constant 0 : index
    %c0_93 = arith.constant 0 : index
    %200 = vector.load %arg2[%199, %c0_92, %c0_93] : memref<8x8x128xbf16, #tpu.memory_space<vmem>>, vector<1x8x128xbf16>
    %201 = vector.shape_cast %200 : vector<1x8x128xbf16> to vector<8x128xbf16>
    %202 = arith.truncf %197 : vector<8x128xf32> to vector<8x128xbf16>
    %203 = tpu.concatenate %201, %202 in 1 : vector<8x128xbf16>, vector<8x128xbf16> -> vector<8x256xbf16>
    %cst_94 = arith.constant dense<0.000000e+00> : vector<8x512xf32>
    %204 = tpu.matmul %203, %3, %cst_94 {dimension_numbers = #tpu.dot_dimension_numbers<[1], [0], [0], [1], [0, 0, 1, 1], [], []>} : vector<8x256xbf16>, vector<256x512xbf16>, vector<8x512xf32> -> vector<8x512xf32>
    %205 = vector.broadcast %4 : vector<1x512xf32> to vector<8x512xf32>
    %206 = arith.addf %204, %205 : vector<8x512xf32>
    %207 = vector.extract_strided_slice %206 {offsets = [0, 0], sizes = [8, 384], strides = [1, 1]} : vector<8x512xf32> to vector<8x384xf32>
    %208 = arith.negf %207 : vector<8x384xf32>
    %209 = math.exp %208 : vector<8x384xf32>
    %cst_95 = arith.constant 1.000000e+00 : f32
    %210 = vector.broadcast %cst_95 : f32 to vector<8x384xf32>
    %211 = arith.addf %210, %209 : vector<8x384xf32>
    %212 = arith.divf %210, %211 : vector<8x384xf32>
    %213 = vector.extract_strided_slice %206 {offsets = [0, 384], sizes = [8, 128], strides = [1, 1]} : vector<8x512xf32> to vector<8x128xf32>
    %214 = math.tanh %213 : vector<8x128xf32>
    %215 = vector.extract_strided_slice %212 {offsets = [0, 0], sizes = [8, 128], strides = [1, 1]} : vector<8x384xf32> to vector<8x128xf32>
    %216 = vector.extract_strided_slice %212 {offsets = [0, 128], sizes = [8, 128], strides = [1, 1]} : vector<8x384xf32> to vector<8x128xf32>
    %217 = vector.extract_strided_slice %212 {offsets = [0, 256], sizes = [8, 128], strides = [1, 1]} : vector<8x384xf32> to vector<8x128xf32>
    %218 = arith.mulf %216, %198 : vector<8x128xf32>
    %219 = arith.mulf %215, %214 : vector<8x128xf32>
    %220 = arith.addf %218, %219 : vector<8x128xf32>
    %221 = math.tanh %220 : vector<8x128xf32>
    %222 = arith.mulf %217, %221 : vector<8x128xf32>
    %c0_96 = arith.constant 0 : index
    %c0_97 = arith.constant 0 : index
    %223 = vector.load %arg9[%c0_96, %c0_97] : memref<8x128xf32, #tpu.memory_space<vmem>>, vector<8x128xf32>
    tpu.vector_store %arg9[%c0_96, %c0_97], %220 {strides = array<i32>} : memref<8x128xf32, #tpu.memory_space<vmem>>, vector<8x128xf32>,
    %c0_98 = arith.constant 0 : index
    %c0_99 = arith.constant 0 : index
    %224 = vector.load %arg8[%c0_98, %c0_99] : memref<8x128xf32, #tpu.memory_space<vmem>>, vector<8x128xf32>
    tpu.vector_store %arg8[%c0_98, %c0_99], %222 {strides = array<i32>} : memref<8x128xf32, #tpu.memory_space<vmem>>, vector<8x128xf32>,
    %225 = arith.index_cast %c6_i32 : i32 to index
    %c0_100 = arith.constant 0 : index
    %c0_101 = arith.constant 0 : index
    %226 = vector.load %arg10[%225, %c0_100, %c0_101] : memref<8x8x128xf32, #tpu.memory_space<vmem>>, vector<1x8x128xf32>
    %227 = vector.shape_cast %226 : vector<1x8x128xf32> to vector<8x128xf32>
    %228 = vector.shape_cast %222 : vector<8x128xf32> to vector<1x8x128xf32>
    tpu.vector_store %arg10[%225, %c0_100, %c0_101], %228 {strides = array<i32>} : memref<8x8x128xf32, #tpu.memory_space<vmem>>, vector<1x8x128xf32>,
    %c7_i32 = arith.constant 7 : i32
    %c0_102 = arith.constant 0 : index
    %c0_103 = arith.constant 0 : index
    %229 = vector.load %arg8[%c0_102, %c0_103] : memref<8x128xf32, #tpu.memory_space<vmem>>, vector<8x128xf32>
    %c0_104 = arith.constant 0 : index
    %c0_105 = arith.constant 0 : index
    %230 = vector.load %arg9[%c0_104, %c0_105] : memref<8x128xf32, #tpu.memory_space<vmem>>, vector<8x128xf32>
    %231 = arith.index_cast %c7_i32 : i32 to index
    %c0_106 = arith.constant 0 : index
    %c0_107 = arith.constant 0 : index
    %232 = vector.load %arg2[%231, %c0_106, %c0_107] : memref<8x8x128xbf16, #tpu.memory_space<vmem>>, vector<1x8x128xbf16>
    %233 = vector.shape_cast %232 : vector<1x8x128xbf16> to vector<8x128xbf16>
    %234 = arith.truncf %229 : vector<8x128xf32> to vector<8x128xbf16>
    %235 = tpu.concatenate %233, %234 in 1 : vector<8x128xbf16>, vector<8x128xbf16> -> vector<8x256xbf16>
    %cst_108 = arith.constant dense<0.000000e+00> : vector<8x512xf32>
    %236 = tpu.matmul %235, %3, %cst_108 {dimension_numbers = #tpu.dot_dimension_numbers<[1], [0], [0], [1], [0, 0, 1, 1], [], []>} : vector<8x256xbf16>, vector<256x512xbf16>, vector<8x512xf32> -> vector<8x512xf32>
    %237 = vector.broadcast %4 : vector<1x512xf32> to vector<8x512xf32>
    %238 = arith.addf %236, %237 : vector<8x512xf32>
    %239 = vector.extract_strided_slice %238 {offsets = [0, 0], sizes = [8, 384], strides = [1, 1]} : vector<8x512xf32> to vector<8x384xf32>
    %240 = arith.negf %239 : vector<8x384xf32>
    %241 = math.exp %240 : vector<8x384xf32>
    %cst_109 = arith.constant 1.000000e+00 : f32
    %242 = vector.broadcast %cst_109 : f32 to vector<8x384xf32>
    %243 = arith.addf %242, %241 : vector<8x384xf32>
    %244 = arith.divf %242, %243 : vector<8x384xf32>
    %245 = vector.extract_strided_slice %238 {offsets = [0, 384], sizes = [8, 128], strides = [1, 1]} : vector<8x512xf32> to vector<8x128xf32>
    %246 = math.tanh %245 : vector<8x128xf32>
    %247 = vector.extract_strided_slice %244 {offsets = [0, 0], sizes = [8, 128], strides = [1, 1]} : vector<8x384xf32> to vector<8x128xf32>
    %248 = vector.extract_strided_slice %244 {offsets = [0, 128], sizes = [8, 128], strides = [1, 1]} : vector<8x384xf32> to vector<8x128xf32>
    %249 = vector.extract_strided_slice %244 {offsets = [0, 256], sizes = [8, 128], strides = [1, 1]} : vector<8x384xf32> to vector<8x128xf32>
    %250 = arith.mulf %248, %230 : vector<8x128xf32>
    %251 = arith.mulf %247, %246 : vector<8x128xf32>
    %252 = arith.addf %250, %251 : vector<8x128xf32>
    %253 = math.tanh %252 : vector<8x128xf32>
    %254 = arith.mulf %249, %253 : vector<8x128xf32>
    %c0_110 = arith.constant 0 : index
    %c0_111 = arith.constant 0 : index
    %255 = vector.load %arg9[%c0_110, %c0_111] : memref<8x128xf32, #tpu.memory_space<vmem>>, vector<8x128xf32>
    tpu.vector_store %arg9[%c0_110, %c0_111], %252 {strides = array<i32>} : memref<8x128xf32, #tpu.memory_space<vmem>>, vector<8x128xf32>,
    %c0_112 = arith.constant 0 : index
    %c0_113 = arith.constant 0 : index
    %256 = vector.load %arg8[%c0_112, %c0_113] : memref<8x128xf32, #tpu.memory_space<vmem>>, vector<8x128xf32>
    tpu.vector_store %arg8[%c0_112, %c0_113], %254 {strides = array<i32>} : memref<8x128xf32, #tpu.memory_space<vmem>>, vector<8x128xf32>,
    %257 = arith.index_cast %c7_i32 : i32 to index
    %c0_114 = arith.constant 0 : index
    %c0_115 = arith.constant 0 : index
    %258 = vector.load %arg10[%257, %c0_114, %c0_115] : memref<8x8x128xf32, #tpu.memory_space<vmem>>, vector<1x8x128xf32>
    %259 = vector.shape_cast %258 : vector<1x8x128xf32> to vector<8x128xf32>
    %260 = vector.shape_cast %254 : vector<8x128xf32> to vector<1x8x128xf32>
    tpu.vector_store %arg10[%257, %c0_114, %c0_115], %260 {strides = array<i32>} : memref<8x8x128xf32, #tpu.memory_space<vmem>>, vector<1x8x128xf32>,
    %c8_i32 = arith.constant 8 : i32
    %c0_116 = arith.constant 0 : index
    %c0_117 = arith.constant 0 : index
    %c0_118 = arith.constant 0 : index
    %261 = vector.load %arg10[%c0_116, %c0_117, %c0_118] : memref<8x8x128xf32, #tpu.memory_space<vmem>>, vector<8x8x128xf32>
    %c0_119 = arith.constant 0 : index
    %c0_120 = arith.constant 0 : index
    %c0_121 = arith.constant 0 : index
    %262 = vector.load %arg2[%c0_119, %c0_120, %c0_121] : memref<8x8x128xbf16, #tpu.memory_space<vmem>>, vector<8x8x128xbf16>
    %263 = arith.extf %262 : vector<8x8x128xbf16> to vector<8x8x128xf32>
    %264 = arith.addf %261, %263 : vector<8x8x128xf32>
    %cst_122 = arith.constant dense<0.000000e+00> : vector<8x8xf32>
    %265 = vector.multi_reduction <add>, %264, %cst_122 [2] : vector<8x8x128xf32> to vector<8x8xf32>
    %266 = vector.shape_cast %265 : vector<8x8xf32> to vector<8x8x1xf32>
    %cst_123 = arith.constant 1.280000e+02 : f32
    %267 = vector.broadcast %cst_123 : f32 to vector<8x8x1xf32>
    %268 = arith.divf %266, %267 : vector<8x8x1xf32>
    %269 = vector.broadcast %268 : vector<8x8x1xf32> to vector<8x8x128xf32>
    %270 = arith.subf %264, %269 : vector<8x8x128xf32>
    %271 = arith.mulf %270, %270 : vector<8x8x128xf32>
    %cst_124 = arith.constant dense<0.000000e+00> : vector<8x8xf32>
    %272 = vector.multi_reduction <add>, %271, %cst_124 [2] : vector<8x8x128xf32> to vector<8x8xf32>
    %273 = vector.shape_cast %272 : vector<8x8xf32> to vector<8x8x1xf32>
    %cst_125 = arith.constant 1.280000e+02 : f32
    %274 = vector.broadcast %cst_125 : f32 to vector<8x8x1xf32>
    %275 = arith.divf %273, %274 : vector<8x8x1xf32>
    %276 = vector.broadcast %268 : vector<8x8x1xf32> to vector<8x8x128xf32>
    %277 = arith.subf %264, %276 : vector<8x8x128xf32>
    %cst_126 = arith.constant 9.99999974E-6 : f32
    %278 = vector.broadcast %cst_126 : f32 to vector<8x8x1xf32>
    %279 = arith.addf %275, %278 : vector<8x8x1xf32>
    %280 = math.rsqrt %279 : vector<8x8x1xf32>
    %281 = vector.broadcast %280 : vector<8x8x1xf32> to vector<8x8x128xf32>
    %282 = arith.mulf %277, %281 : vector<8x8x128xf32>
    %c0_127 = arith.constant 0 : index
    %c0_128 = arith.constant 0 : index
    %283 = vector.load %arg5[%c0_127, %c0_128] : memref<1x128xf32, #tpu.memory_space<vmem>>, vector<1x128xf32>
    %284 = vector.shape_cast %283 : vector<1x128xf32> to vector<1x1x128xf32>
    %285 = vector.broadcast %284 : vector<1x1x128xf32> to vector<8x8x128xf32>
    %286 = arith.mulf %282, %285 : vector<8x8x128xf32>
    %c0_129 = arith.constant 0 : index
    %c0_130 = arith.constant 0 : index
    %287 = vector.load %arg6[%c0_129, %c0_130] : memref<1x128xf32, #tpu.memory_space<vmem>>, vector<1x128xf32>
    %288 = vector.shape_cast %287 : vector<1x128xf32> to vector<1x1x128xf32>
    %289 = vector.broadcast %288 : vector<1x1x128xf32> to vector<8x8x128xf32>
    %290 = arith.addf %286, %289 : vector<8x8x128xf32>
    %291 = arith.truncf %290 : vector<8x8x128xf32> to vector<8x8x128xbf16>
    %c0_131 = arith.constant 0 : index
    %c0_132 = arith.constant 0 : index
    %c0_133 = arith.constant 0 : index
    %292 = vector.load %arg7[%c0_131, %c0_132, %c0_133] : memref<8x8x128xbf16, #tpu.memory_space<vmem>>, vector<8x8x128xbf16>
    tpu.vector_store %arg7[%c0_131, %c0_132, %c0_133], %291 {strides = array<i32>} : memref<8x8x128xbf16, #tpu.memory_space<vmem>>, vector<8x8x128xbf16>,
    return
  }
  func.func @transform_0(%arg0: i32, %arg1: i32) -> (i32, i32, i32) {
    %c0_i32 = arith.constant 0 : i32
    %c0_i32_0 = arith.constant 0 : i32
    return %arg1, %arg0, %c0_i32 : i32, i32, i32
  }
  func.func @transform_1(%arg0: i32, %arg1: i32) -> (i32, i32) {
    %c0_i32 = arith.constant 0 : i32
    %c0_i32_0 = arith.constant 0 : i32
    %c0_i32_1 = arith.constant 0 : i32
    return %c0_i32, %c0_i32_0 : i32, i32
  }
  func.func @transform_2(%arg0: i32, %arg1: i32) -> (i32, i32) {
    %c0_i32 = arith.constant 0 : i32
    %c0_i32_0 = arith.constant 0 : i32
    %c0_i32_1 = arith.constant 0 : i32
    return %c0_i32, %c0_i32_0 : i32, i32
  }
  func.func @transform_3(%arg0: i32, %arg1: i32) -> (i32, i32) {
    %c0_i32 = arith.constant 0 : i32
    %c0_i32_0 = arith.constant 0 : i32
    %c0_i32_1 = arith.constant 0 : i32
    return %c0_i32, %c0_i32_0 : i32, i32
  }
  func.func @transform_4(%arg0: i32, %arg1: i32) -> (i32, i32) {
    %c0_i32 = arith.constant 0 : i32
    %c0_i32_0 = arith.constant 0 : i32
    %c0_i32_1 = arith.constant 0 : i32
    return %c0_i32, %c0_i32_0 : i32, i32
  }
  func.func @transform_5(%arg0: i32, %arg1: i32) -> (i32, i32, i32) {
    %c0_i32 = arith.constant 0 : i32
    %c0_i32_0 = arith.constant 0 : i32
    return %arg1, %arg0, %c0_i32 : i32, i32, i32
  }
}

</mosaic_0001>

<llo_original>
// kernel: _plstm_forward.1
$region0: #{_plstm_forward.1}
  #allocation0 [shape = 'u32[]', space=smem, size = 0x4, offset = 0x4, fixed_abs, tag = 'smem constant byte address 0x4 - core index']
  #allocation1 [shape = 'u32[72,128]{1,0:T(1,128)}', space=vmem, size = 0x9000, scoped, tag = 'internal scratch']
  #allocation2 [shape = 'f32[8,128]{1,0:T(8,128)}', space=vmem, size = 0x1000, scoped, tag = 'scratch operand']
  #allocation3 [shape = 'f32[8,128]{1,0:T(8,128)}', space=vmem, size = 0x1000, scoped, tag = 'scratch operand']
  #allocation4 [shape = 'f32[8,8,128]{2,1,0:T(8,128)}', space=vmem, size = 0x8000, scoped, tag = 'scratch operand']
  %s0 = inlined_call_operand.vmem [shape: bf16[8,8,128], index: 0, kind: input, shape index: {}]
  %s1 = inlined_call_operand.vmem [shape: bf16[256,512], index: 1, kind: input, shape index: {}]
  %s2 = inlined_call_operand.vmem [shape: f32[1,512], index: 2, kind: input, shape index: {}]
  %s3 = inlined_call_operand.vmem [shape: f32[1,128], index: 3, kind: input, shape index: {}]
  %s4 = inlined_call_operand.vmem [shape: f32[1,128], index: 4, kind: input, shape index: {}]
  %s5 = inlined_call_operand.hbm [shape: bf16[8,8,128], index: 5, kind: output, shape index: {}]
  %s6 = sld [smem:[#allocation0]]
  $region34: #{_plstm_forward.1} parent=0
    _
  %s8 = ssub.s32 1, %s6
  %s9 = scalar_select 0, %s8, %s6
  $region1: #{_plstm_forward.1} parent=0
    #allocation5 [shape = 'u8[16384]{0}', space=vmem, size = 0x4000, scoped, tag = 'output window, operand 0, single buffered']
    #allocation6 [shape = 's32[1]{0}', space=sflag, size = 0x4, scoped, tag = 'scoped memory for _plstm_forward.1']
    %10 = vsyncpa [#allocation6], 0
    // Predicated region
    $region2: #{_plstm_forward.1} parent=1 // pred_check
      _
    $region3: #{_plstm_forward.1} parent=1 // pred_check_branch
      %12 = sbr.rel (0) target = $region5
    $region4: #{_plstm_forward.1} parent=1 // pred_region
      _
    $region5: #{_plstm_forward.1} parent=1 // pred_fallthru
      _
    // Predicated region
    $region6: #{_plstm_forward.1} parent=1 // pred_check
      _
    $region7: #{_plstm_forward.1} parent=1 // pred_check_branch
      %14 = sbr.rel (0) target = $region9
    $region8: #{_plstm_forward.1} parent=1 // pred_region
      _
    $region9: #{_plstm_forward.1} parent=1 // pred_fallthru
      _
    // Predicated region
    $region10: #{_plstm_forward.1} parent=1 // pred_check
      _
    $region11: #{_plstm_forward.1} parent=1 // pred_check_branch
      %16 = sbr.rel (0) target = $region13
    $region12: #{_plstm_forward.1} parent=1 // pred_region
      _
    $region13: #{_plstm_forward.1} parent=1 // pred_fallthru
      _
    // Predicated region
    $region14: #{_plstm_forward.1} parent=1 // pred_check
      _
    $region15: #{_plstm_forward.1} parent=1 // pred_check_branch
      %18 = sbr.rel (0) target = $region17
    $region16: #{_plstm_forward.1} parent=1 // pred_region
      _
    $region17: #{_plstm_forward.1} parent=1 // pred_fallthru
      _
    // Predicated region
    $region18: #{_plstm_forward.1} parent=1 // pred_check
      _
    $region19: #{_plstm_forward.1} parent=1 // pred_check_branch
      %20 = sbr.rel (0) target = $region21
    $region20: #{_plstm_forward.1} parent=1 // pred_region
      _
    $region21: #{_plstm_forward.1} parent=1 // pred_fallthru
      _
    %p21 = scmp.eq.s32.totalorder 0, 0
    // Predicated region
    $region22: #{_plstm_forward.1} parent=1 // pred_check
      %p22 = pneg %p21
    $region23: #{_plstm_forward.1} parent=1 // pred_check_branch
      %24 = sbr.rel (%p22) target = $region25
    $region24: #{_plstm_forward.1} parent=1 // pred_region
      %25 = vst [vmem:[#allocation2] sm:$0xff] 0.0
      %26 = vst [vmem:[#allocation3] sm:$0xff] 0.0
    $region25: #{_plstm_forward.1} parent=1 // pred_fallthru
      _
    %v27 = vld [vmem:[%s1] sm:$0xff]
    %v28 = vld [vmem:[%s1 + $0x8] sm:$0xff]
    %v29 = vld [vmem:[%s1 + $0x10] sm:$0xff]
    %v30 = vld [vmem:[%s1 + $0x18] sm:$0xff]
    %v31 = vld [vmem:[%s1 + $0x20] sm:$0xff]
    %v32 = vld [vmem:[%s1 + $0x28] sm:$0xff]
    %v33 = vld [vmem:[%s1 + $0x30] sm:$0xff]
    %v34 = vld [vmem:[%s1 + $0x38] sm:$0xff]
    %v35 = vld [vmem:[%s1 + $0x40] sm:$0xff]
    %v36 = vld [vmem:[%s1 + $0x48] sm:$0xff]
    %v37 = vld [vmem:[%s1 + $0x50] sm:$0xff]
    %v38 = vld [vmem:[%s1 + $0x58] sm:$0xff]
    %v39 = vld [vmem:[%s1 + $0x60] sm:$0xff]
    %v40 = vld [vmem:[%s1 + $0x68] sm:$0xff]
    %v41 = vld [vmem:[%s1 + $0x70] sm:$0xff]
    %v42 = vld [vmem:[%s1 + $0x78] sm:$0xff]
    %v43 = vld [vmem:[%s1 + $0x80] sm:$0xff]
    %v44 = vld [vmem:[%s1 + $0x88] sm:$0xff]
    %v45 = vld [vmem:[%s1 + $0x90] sm:$0xff]
    %v46 = vld [vmem:[%s1 + $0x98] sm:$0xff]
    %v47 = vld [vmem:[%s1 + $0xa0] sm:$0xff]
    %v48 = vld [vmem:[%s1 + $0xa8] sm:$0xff]
    %v49 = vld [vmem:[%s1 + $0xb0] sm:$0xff]
    %v50 = vld [vmem:[%s1 + $0xb8] sm:$0xff]
    %v51 = vld [vmem:[%s1 + $0xc0] sm:$0xff]
    %v52 = vld [vmem:[%s1 + $0xc8] sm:$0xff]
    %v53 = vld [vmem:[%s1 + $0xd0] sm:$0xff]
    %v54 = vld [vmem:[%s1 + $0xd8] sm:$0xff]
    %v55 = vld [vmem:[%s1 + $0xe0] sm:$0xff]
    %v56 = vld [vmem:[%s1 + $0xe8] sm:$0xff]
    %v57 = vld [vmem:[%s1 + $0xf0] sm:$0xff]
    %v58 = vld [vmem:[%s1 + $0xf8] sm:$0xff]
    %v59 = vld [vmem:[%s1 + $0x100] sm:$0xff]
    %v60 = vld [vmem:[%s1 + $0x108] sm:$0xff]
    %v61 = vld [vmem:[%s1 + $0x110] sm:$0xff]
    %v62 = vld [vmem:[%s1 + $0x118] sm:$0xff]
    %v63 = vld [vmem:[%s1 + $0x120] sm:$0xff]
    %v64 = vld [vmem:[%s1 + $0x128] sm:$0xff]
    %v65 = vld [vmem:[%s1 + $0x130] sm:$0xff]
    %v66 = vld [vmem:[%s1 + $0x138] sm:$0xff]
    %v67 = vld [vmem:[%s1 + $0x140] sm:$0xff]
    %v68 = vld [vmem:[%s1 + $0x148] sm:$0xff]
    %v69 = vld [vmem:[%s1 + $0x150] sm:$0xff]
    %v70 = vld [vmem:[%s1 + $0x158] sm:$0xff]
    %v71 = vld [vmem:[%s1 + $0x160] sm:$0xff]
    %v72 = vld [vmem:[%s1 + $0x168] sm:$0xff]
    %v73 = vld [vmem:[%s1 + $0x170] sm:$0xff]
    %v74 = vld [vmem:[%s1 + $0x178] sm:$0xff]
    %v75 = vld [vmem:[%s1 + $0x180] sm:$0xff]
    %v76 = vld [vmem:[%s1 + $0x188] sm:$0xff]
    %v77 = vld [vmem:[%s1 + $0x190] sm:$0xff]
    %v78 = vld [vmem:[%s1 + $0x198] sm:$0xff]
    %v79 = vld [vmem:[%s1 + $0x1a0] sm:$0xff]
    %v80 = vld [vmem:[%s1 + $0x1a8] sm:$0xff]
    %v81 = vld [vmem:[%s1 + $0x1b0] sm:$0xff]
    %v82 = vld [vmem:[%s1 + $0x1b8] sm:$0xff]
    %v83 = vld [vmem:[%s1 + $0x1c0] sm:$0xff]
    %v84 = vld [vmem:[%s1 + $0x1c8] sm:$0xff]
    %v85 = vld [vmem:[%s1 + $0x1d0] sm:$0xff]
    %v86 = vld [vmem:[%s1 + $0x1d8] sm:$0xff]
    %v87 = vld [vmem:[%s1 + $0x1e0] sm:$0xff]
    %v88 = vld [vmem:[%s1 + $0x1e8] sm:$0xff]
    %v89 = vld [vmem:[%s1 + $0x1f0] sm:$0xff]
    %v90 = vld [vmem:[%s1 + $0x1f8] sm:$0xff]
    %v91 = vld [vmem:[%s2] sm:$0xf]
    %v92 = vld [vmem:[#allocation2] sm:$0xff]
    %v93 = vld [vmem:[#allocation3] sm:$0xff]
    %v94 = vld [vmem:[%s0] sm:$0xf]
    %v95 = vpack.c.bf16 %v92, %v92
    %v97 = vperm.slane %v91, 0
    %v98 = vperm.slane %v91, 1
    %v99 = vperm.slane %v91, 2
    %v100 = vperm.slane %v91, 3
    %v169 = vunpack.c.l.b16 %v27
    %v170 = vunpack.c.h.b16 %v27
    %v171 = vunpack.c.l.b16 %v28
    %v172 = vunpack.c.h.b16 %v28
    %v173 = vunpack.c.l.b16 %v29
    %v174 = vunpack.c.h.b16 %v29
    %v175 = vunpack.c.l.b16 %v30
    %v176 = vunpack.c.h.b16 %v30
    %v177 = vunpack.c.l.b16 %v31
    %v178 = vunpack.c.h.b16 %v31
    %v179 = vunpack.c.l.b16 %v32
    %v180 = vunpack.c.h.b16 %v32
    %v181 = vunpack.c.l.b16 %v33
    %v182 = vunpack.c.h.b16 %v33
    %v183 = vunpack.c.l.b16 %v34
    %v184 = vunpack.c.h.b16 %v34
    %v185 = vunpack.c.l.b16 %v35
    %v186 = vunpack.c.h.b16 %v35
    %v187 = vunpack.c.l.b16 %v36
    %v188 = vunpack.c.h.b16 %v36
    %v189 = vunpack.c.l.b16 %v37
    %v190 = vunpack.c.h.b16 %v37
    %v191 = vunpack.c.l.b16 %v38
    %v192 = vunpack.c.h.b16 %v38
    %v193 = vunpack.c.l.b16 %v39
    %v194 = vunpack.c.h.b16 %v39
    %v195 = vunpack.c.l.b16 %v40
    %v196 = vunpack.c.h.b16 %v40
    %v197 = vunpack.c.l.b16 %v41
    %v198 = vunpack.c.h.b16 %v41
    %v199 = vunpack.c.l.b16 %v42
    %v200 = vunpack.c.h.b16 %v42
    %v201 = vunpack.c.l.b16 %v43
    %v202 = vunpack.c.h.b16 %v43
    %v203 = vunpack.c.l.b16 %v44
    %v204 = vunpack.c.h.b16 %v44
    %v205 = vunpack.c.l.b16 %v45
    %v206 = vunpack.c.h.b16 %v45
    %v207 = vunpack.c.l.b16 %v46
    %v208 = vunpack.c.h.b16 %v46
    %v209 = vunpack.c.l.b16 %v47
    %v210 = vunpack.c.h.b16 %v47
    %v211 = vunpack.c.l.b16 %v48
    %v212 = vunpack.c.h.b16 %v48
    %v213 = vunpack.c.l.b16 %v49
    %v214 = vunpack.c.h.b16 %v49
    %v215 = vunpack.c.l.b16 %v50
    %v216 = vunpack.c.h.b16 %v50
    %v217 = vunpack.c.l.b16 %v51
    %v218 = vunpack.c.h.b16 %v51
    %v219 = vunpack.c.l.b16 %v52
    %v220 = vunpack.c.h.b16 %v52
    %v221 = vunpack.c.l.b16 %v53
    %v222 = vunpack.c.h.b16 %v53
    %v223 = vunpack.c.l.b16 %v54
    %v224 = vunpack.c.h.b16 %v54
    %v225 = vunpack.c.l.b16 %v55
    %v226 = vunpack.c.h.b16 %v55
    %v227 = vunpack.c.l.b16 %v56
    %v228 = vunpack.c.h.b16 %v56
    %v229 = vunpack.c.l.b16 %v57
    %v230 = vunpack.c.h.b16 %v57
    %v231 = vunpack.c.l.b16 %v58
    %v232 = vunpack.c.h.b16 %v58
    %v233 = vunpack.c.l.b16 %v59
    %v234 = vunpack.c.h.b16 %v59
    %v235 = vunpack.c.l.b16 %v60
    %v236 = vunpack.c.h.b16 %v60
    %v237 = vunpack.c.l.b16 %v61
    %v238 = vunpack.c.h.b16 %v61
    %v239 = vunpack.c.l.b16 %v62
    %v240 = vunpack.c.h.b16 %v62
    %v241 = vunpack.c.l.b16 %v63
    %v242 = vunpack.c.h.b16 %v63
    %v243 = vunpack.c.l.b16 %v64
    %v244 = vunpack.c.h.b16 %v64
    %v245 = vunpack.c.l.b16 %v65
    %v246 = vunpack.c.h.b16 %v65
    %v247 = vunpack.c.l.b16 %v66
    %v248 = vunpack.c.h.b16 %v66
    %v249 = vunpack.c.l.b16 %v67
    %v250 = vunpack.c.h.b16 %v67
    %v251 = vunpack.c.l.b16 %v68
    %v252 = vunpack.c.h.b16 %v68
    %v253 = vunpack.c.l.b16 %v69
    %v254 = vunpack.c.h.b16 %v69
    %v255 = vunpack.c.l.b16 %v70
    %v256 = vunpack.c.h.b16 %v70
    %v257 = vunpack.c.l.b16 %v71
    %v258 = vunpack.c.h.b16 %v71
    %v259 = vunpack.c.l.b16 %v72
    %v260 = vunpack.c.h.b16 %v72
    %v261 = vunpack.c.l.b16 %v73
    %v262 = vunpack.c.h.b16 %v73
    %v263 = vunpack.c.l.b16 %v74
    %v264 = vunpack.c.h.b16 %v74
    %v265 = vunpack.c.l.b16 %v75
    %v266 = vunpack.c.h.b16 %v75
    %v267 = vunpack.c.l.b16 %v76
    %v268 = vunpack.c.h.b16 %v76
    %v269 = vunpack.c.l.b16 %v77
    %v270 = vunpack.c.h.b16 %v77
    %v271 = vunpack.c.l.b16 %v78
    %v272 = vunpack.c.h.b16 %v78
    %v273 = vunpack.c.l.b16 %v79
    %v274 = vunpack.c.h.b16 %v79
    %v275 = vunpack.c.l.b16 %v80
    %v276 = vunpack.c.h.b16 %v80
    %v277 = vunpack.c.l.b16 %v81
    %v278 = vunpack.c.h.b16 %v81
    %v279 = vunpack.c.l.b16 %v82
    %v280 = vunpack.c.h.b16 %v82
    %v281 = vunpack.c.l.b16 %v83
    %v282 = vunpack.c.h.b16 %v83
    %v283 = vunpack.c.l.b16 %v84
    %v284 = vunpack.c.h.b16 %v84
    %v285 = vunpack.c.l.b16 %v85
    %v286 = vunpack.c.h.b16 %v85
    %v287 = vunpack.c.l.b16 %v86
    %v288 = vunpack.c.h.b16 %v86
    %v289 = vunpack.c.l.b16 %v87
    %v290 = vunpack.c.h.b16 %v87
    %v291 = vunpack.c.l.b16 %v88
    %v292 = vunpack.c.h.b16 %v88
    %v293 = vunpack.c.l.b16 %v89
    %v294 = vunpack.c.h.b16 %v89
    %v295 = vunpack.c.l.b16 %v90
    %v296 = vunpack.c.h.b16 %v90
    %v297 = vpack.c.b16 %v173, %v169
    %v298 = vpack.c.b16 %v174, %v170
    %v299 = vpack.c.b16 %v175, %v171
    %v300 = vpack.c.b16 %v176, %v172
    %v301 = vpack.c.b16 %v181, %v177
    %v302 = vpack.c.b16 %v182, %v178
    %v303 = vpack.c.b16 %v183, %v179
    %v304 = vpack.c.b16 %v184, %v180
    %v305 = vpack.c.b16 %v189, %v185
    %v306 = vpack.c.b16 %v190, %v186
    %v307 = vpack.c.b16 %v191, %v187
    %v308 = vpack.c.b16 %v192, %v188
    %v309 = vpack.c.b16 %v197, %v193
    %v310 = vpack.c.b16 %v198, %v194
    %v311 = vpack.c.b16 %v199, %v195
    %v312 = vpack.c.b16 %v200, %v196
    %v313 = vpack.c.b16 %v205, %v201
    %v314 = vpack.c.b16 %v206, %v202
    %v315 = vpack.c.b16 %v207, %v203
    %v316 = vpack.c.b16 %v208, %v204
    %v317 = vpack.c.b16 %v213, %v209
    %v318 = vpack.c.b16 %v214, %v210
    %v319 = vpack.c.b16 %v215, %v211
    %v320 = vpack.c.b16 %v216, %v212
    %v321 = vpack.c.b16 %v221, %v217
    %v322 = vpack.c.b16 %v222, %v218
    %v323 = vpack.c.b16 %v223, %v219
    %v324 = vpack.c.b16 %v224, %v220
    %v325 = vpack.c.b16 %v229, %v225
    %v326 = vpack.c.b16 %v230, %v226
    %v327 = vpack.c.b16 %v231, %v227
    %v328 = vpack.c.b16 %v232, %v228
    %v329 = vpack.c.b16 %v237, %v233
    %v330 = vpack.c.b16 %v238, %v234
    %v331 = vpack.c.b16 %v239, %v235
    %v332 = vpack.c.b16 %v240, %v236
    %v333 = vpack.c.b16 %v245, %v241
    %v334 = vpack.c.b16 %v246, %v242
    %v335 = vpack.c.b16 %v247, %v243
    %v336 = vpack.c.b16 %v248, %v244
    %v337 = vpack.c.b16 %v253, %v249
    %v338 = vpack.c.b16 %v254, %v250
    %v339 = vpack.c.b16 %v255, %v251
    %v340 = vpack.c.b16 %v256, %v252
    %v341 = vpack.c.b16 %v261, %v257
    %v342 = vpack.c.b16 %v262, %v258
    %v343 = vpack.c.b16 %v263, %v259
    %v344 = vpack.c.b16 %v264, %v260
    %v345 = vpack.c.b16 %v269, %v265
    %v346 = vpack.c.b16 %v270, %v266
    %v347 = vpack.c.b16 %v271, %v267
    %v348 = vpack.c.b16 %v272, %v268
    %v349 = vpack.c.b16 %v277, %v273
    %v350 = vpack.c.b16 %v278, %v274
    %v351 = vpack.c.b16 %v279, %v275
    %v352 = vpack.c.b16 %v280, %v276
    %v353 = vpack.c.b16 %v285, %v281
    %v354 = vpack.c.b16 %v286, %v282
    %v355 = vpack.c.b16 %v287, %v283
    %v356 = vpack.c.b16 %v288, %v284
    %v357 = vpack.c.b16 %v293, %v289
    %v358 = vpack.c.b16 %v294, %v290
    %v359 = vpack.c.b16 %v295, %v291
    %v360 = vpack.c.b16 %v296, %v292
    %425 = vmatpush.bf16.msra.mxu0 %v325
    %426 = vmatpush.bf16.msra.mxu0 %v321
    %427 = vmatpush.bf16.msra.mxu0 %v317
    %428 = vmatpush.bf16.msra.mxu0 %v313
    %429 = vmatpush.bf16.msra.mxu0 %v309
    %430 = vmatpush.bf16.msra.mxu0 %v305
    %431 = vmatpush.bf16.msra.mxu0 %v301
    %432 = vmatpush.bf16.msra.mxu0 %v297
    %433 = vmatmul.bf16.gmra.mxu0 %v94
    %v434 = vpop.f32.mrf.mxu0
    %v435 = vadd.f32 %v97, %v434
    %v436 = vpop.f32.mrf.mxu0
    %437 = vdwg.mxu0
    %438 = vmatpush.bf16.msra.mxu0 %v357
    %439 = vmatpush.bf16.msra.mxu0 %v353
    %440 = vmatpush.bf16.msra.mxu0 %v349
    %441 = vmatpush.bf16.msra.mxu0 %v345
    %442 = vmatpush.bf16.msra.mxu0 %v341
    %443 = vmatpush.bf16.msra.mxu0 %v337
    %444 = vmatpush.bf16.msra.mxu0 %v333
    %445 = vmatpush.bf16.msra.mxu0 %v329
    %446 = vmatmul.bf16.gmra.mxu0 %v95
    %v447 = vpop.f32.mrf.mxu0
    %v448 = vadd.f32 %v435, %v447
    %v449 = vpop.f32.mrf.mxu0
    %450 = vdwg.mxu0
    %451 = vmatpush.bf16.msra.mxu0 %v326
    %452 = vmatpush.bf16.msra.mxu0 %v322
    %453 = vmatpush.bf16.msra.mxu0 %v318
    %454 = vmatpush.bf16.msra.mxu0 %v314
    %455 = vmatpush.bf16.msra.mxu0 %v310
    %456 = vmatpush.bf16.msra.mxu0 %v306
    %457 = vmatpush.bf16.msra.mxu0 %v302
    %458 = vmatpush.bf16.msra.mxu0 %v298
    %459 = vmatmul.bf16.gmra.mxu0 %v94
    %v460 = vpop.f32.mrf.mxu0
    %v461 = vadd.f32 %v98, %v460
    %v462 = vpop.f32.mrf.mxu0
    %463 = vdwg.mxu0
    %464 = vmatpush.bf16.msra.mxu0 %v358
    %465 = vmatpush.bf16.msra.mxu0 %v354
    %466 = vmatpush.bf16.msra.mxu0 %v350
    %467 = vmatpush.bf16.msra.mxu0 %v346
    %468 = vmatpush.bf16.msra.mxu0 %v342
    %469 = vmatpush.bf16.msra.mxu0 %v338
    %470 = vmatpush.bf16.msra.mxu0 %v334
    %471 = vmatpush.bf16.msra.mxu0 %v330
    %472 = vmatmul.bf16.gmra.mxu0 %v95
    %v473 = vpop.f32.mrf.mxu0
    %v474 = vadd.f32 %v461, %v473
    %v475 = vpop.f32.mrf.mxu0
    %476 = vdwg.mxu0
    %477 = vmatpush.bf16.msra.mxu0 %v327
    %478 = vmatpush.bf16.msra.mxu0 %v323
    %479 = vmatpush.bf16.msra.mxu0 %v319
    %480 = vmatpush.bf16.msra.mxu0 %v315
    %481 = vmatpush.bf16.msra.mxu0 %v311
    %482 = vmatpush.bf16.msra.mxu0 %v307
    %483 = vmatpush.bf16.msra.mxu0 %v303
    %484 = vmatpush.bf16.msra.mxu0 %v299
    %485 = vmatmul.bf16.gmra.mxu0 %v94
    %v486 = vpop.f32.mrf.mxu0
    %v487 = vadd.f32 %v99, %v486
    %v488 = vpop.f32.mrf.mxu0
    %489 = vdwg.mxu0
    %490 = vmatpush.bf16.msra.mxu0 %v359
    %491 = vmatpush.bf16.msra.mxu0 %v355
    %492 = vmatpush.bf16.msra.mxu0 %v351
    %493 = vmatpush.bf16.msra.mxu0 %v347
    %494 = vmatpush.bf16.msra.mxu0 %v343
    %495 = vmatpush.bf16.msra.mxu0 %v339
    %496 = vmatpush.bf16.msra.mxu0 %v335
    %497 = vmatpush.bf16.msra.mxu0 %v331
    %498 = vmatmul.bf16.gmra.mxu0 %v95
    %v499 = vpop.f32.mrf.mxu0
    %v500 = vadd.f32 %v487, %v499
    %v501 = vpop.f32.mrf.mxu0
    %502 = vdwg.mxu0
    %503 = vmatpush.bf16.msra.mxu0 %v328
    %504 = vmatpush.bf16.msra.mxu0 %v324
    %505 = vmatpush.bf16.msra.mxu0 %v320
    %506 = vmatpush.bf16.msra.mxu0 %v316
    %507 = vmatpush.bf16.msra.mxu0 %v312
    %508 = vmatpush.bf16.msra.mxu0 %v308
    %509 = vmatpush.bf16.msra.mxu0 %v304
    %510 = vmatpush.bf16.msra.mxu0 %v300
    %511 = vmatmul.bf16.gmra.mxu0 %v94
    %v512 = vpop.f32.mrf.mxu0
    %v513 = vadd.f32 %v100, %v512
    %v514 = vpop.f32.mrf.mxu0
    %515 = vdwg.mxu0
    %516 = vmatpush.bf16.msra.mxu0 %v360
    %517 = vmatpush.bf16.msra.mxu0 %v356
    %518 = vmatpush.bf16.msra.mxu0 %v352
    %519 = vmatpush.bf16.msra.mxu0 %v348
    %520 = vmatpush.bf16.msra.mxu0 %v344
    %521 = vmatpush.bf16.msra.mxu0 %v340
    %522 = vmatpush.bf16.msra.mxu0 %v336
    %523 = vmatpush.bf16.msra.mxu0 %v332
    %524 = vmatmul.bf16.gmra.mxu0 %v95
    %v525 = vpop.f32.mrf.mxu0
    %v526 = vadd.f32 %v513, %v525
    %v527 = vpop.f32.mrf.mxu0
    %528 = vdwg.mxu0
    %v529 = vxor.u32 %v448, 2147483648
    %v530 = vxor.u32 %v474, 2147483648
    %v531 = vxor.u32 %v500, 2147483648
    %v532 = vmul.f32 %v529, 1.442695
    %v533 = vpow.pop %v532
    %v534 = vmul.f32 %v530, 1.442695
    %v535 = vpow.pop %v534
    %v536 = vmul.f32 %v531, 1.442695
    %v537 = vpow.pop %v536
    %v538 = vadd.f32 %v533, 1.0
    %v539 = vadd.f32 %v535, 1.0
    %v540 = vadd.f32 %v537, 1.0
    %v541 = vrcp.pop %v538
    %v542 = vmul.f32 %v538, %v541
    %v543 = vsub.f32 1.0, %v542
    %v544 = vmul.f32 %v541, %v543
    %v545 = vadd.f32 %v541, %v544
    %vm546 = vweird.f32 %v538
    %vm547 = vweird.f32 %v541
    %vm548 = vmor %vm546, %vm547
    %v549 = vsel %vm548, %v541, %v545
    %v550 = vand.u32 2147483647, %v538
    %vm551 = vcmp.eq.f32.partialorder %v550, 8.507059e+37
    %v552 = vand.u32 %v538, 2147483648
    %v553 = vor.u32 1.1754944e-38, %v552
    %v554 = vsel %vm551, %v553, %v549
    %v555 = vmul.f32 1.0, %v554
    %v556 = vrcp.pop %v539
    %v557 = vmul.f32 %v539, %v556
    %v558 = vsub.f32 1.0, %v557
    %v559 = vmul.f32 %v556, %v558
    %v560 = vadd.f32 %v556, %v559
    %vm561 = vweird.f32 %v539
    %vm562 = vweird.f32 %v556
    %vm563 = vmor %vm561, %vm562
    %v564 = vsel %vm563, %v556, %v560
    %v565 = vand.u32 2147483647, %v539
    %vm566 = vcmp.eq.f32.partialorder %v565, 8.507059e+37
    %v567 = vand.u32 %v539, 2147483648
    %v568 = vor.u32 1.1754944e-38, %v567
    %v569 = vsel %vm566, %v568, %v564
    %v570 = vmul.f32 1.0, %v569
    %v571 = vrcp.pop %v540
    %v572 = vmul.f32 %v540, %v571
    %v573 = vsub.f32 1.0, %v572
    %v574 = vmul.f32 %v571, %v573
    %v575 = vadd.f32 %v571, %v574
    %vm576 = vweird.f32 %v540
    %vm577 = vweird.f32 %v571
    %vm578 = vmor %vm576, %vm577
    %v579 = vsel %vm578, %v571, %v575
    %v580 = vand.u32 2147483647, %v540
    %vm581 = vcmp.eq.f32.partialorder %v580, 8.507059e+37
    %v582 = vand.u32 %v540, 2147483648
    %v583 = vor.u32 1.1754944e-38, %v582
    %v584 = vsel %vm581, %v583, %v579
    %v585 = vmul.f32 1.0, %v584
    %v586 = vtanh.pop %v526
    %v587 = vmul.f32 %v570, %v93
    %v588 = vmul.f32 %v555, %v586
    %v589 = vadd.f32 %v587, %v588
    %v590 = vtanh.pop %v589
    %v591 = vmul.f32 %v585, %v590
    %592 = vst [vmem:[#allocation3] sm:$0xff] %v589
    %593 = vst [vmem:[#allocation2] sm:$0xff] %v591
    %594 = vst [vmem:[#allocation4] sm:$0xff] %v591
    %v595 = vld [vmem:[#allocation2] sm:$0xff]
    %v596 = vld [vmem:[#allocation3] sm:$0xff]
    %s597 = scalar_lea.vmem %s0, 4
    %v598 = vld [vmem:[%s597] sm:$0xf]
    %v599 = vpack.c.bf16 %v595, %v595
    %600 = vmatpush.bf16.msra.mxu0 %v325
    %601 = vmatpush.bf16.msra.mxu0 %v321
    %602 = vmatpush.bf16.msra.mxu0 %v317
    %603 = vmatpush.bf16.msra.mxu0 %v313
    %604 = vmatpush.bf16.msra.mxu0 %v309
    %605 = vmatpush.bf16.msra.mxu0 %v305
    %606 = vmatpush.bf16.msra.mxu0 %v301
    %607 = vmatpush.bf16.msra.mxu0 %v297
    %608 = vmatmul.bf16.gmra.mxu0 %v598
    %v609 = vpop.f32.mrf.mxu0
    %v610 = vadd.f32 %v97, %v609
    %v611 = vpop.f32.mrf.mxu0
    %612 = vdwg.mxu0
    %613 = vmatpush.bf16.msra.mxu0 %v357
    %614 = vmatpush.bf16.msra.mxu0 %v353
    %615 = vmatpush.bf16.msra.mxu0 %v349
    %616 = vmatpush.bf16.msra.mxu0 %v345
    %617 = vmatpush.bf16.msra.mxu0 %v341
    %618 = vmatpush.bf16.msra.mxu0 %v337
    %619 = vmatpush.bf16.msra.mxu0 %v333
    %620 = vmatpush.bf16.msra.mxu0 %v329
    %621 = vmatmul.bf16.gmra.mxu0 %v599
    %v622 = vpop.f32.mrf.mxu0
    %v623 = vadd.f32 %v610, %v622
    %v624 = vpop.f32.mrf.mxu0
    %625 = vdwg.mxu0
    %626 = vmatpush.bf16.msra.mxu0 %v326
    %627 = vmatpush.bf16.msra.mxu0 %v322
    %628 = vmatpush.bf16.msra.mxu0 %v318
    %629 = vmatpush.bf16.msra.mxu0 %v314
    %630 = vmatpush.bf16.msra.mxu0 %v310
    %631 = vmatpush.bf16.msra.mxu0 %v306
    %632 = vmatpush.bf16.msra.mxu0 %v302
    %633 = vmatpush.bf16.msra.mxu0 %v298
    %634 = vmatmul.bf16.gmra.mxu0 %v598
    %v635 = vpop.f32.mrf.mxu0
    %v636 = vadd.f32 %v98, %v635
    %v637 = vpop.f32.mrf.mxu0
    %638 = vdwg.mxu0
    %639 = vmatpush.bf16.msra.mxu0 %v358
    %640 = vmatpush.bf16.msra.mxu0 %v354
    %641 = vmatpush.bf16.msra.mxu0 %v350
    %642 = vmatpush.bf16.msra.mxu0 %v346
    %643 = vmatpush.bf16.msra.mxu0 %v342
    %644 = vmatpush.bf16.msra.mxu0 %v338
    %645 = vmatpush.bf16.msra.mxu0 %v334
    %646 = vmatpush.bf16.msra.mxu0 %v330
    %647 = vmatmul.bf16.gmra.mxu0 %v599
    %v648 = vpop.f32.mrf.mxu0
    %v649 = vadd.f32 %v636, %v648
    %v650 = vpop.f32.mrf.mxu0
    %651 = vdwg.mxu0
    %652 = vmatpush.bf16.msra.mxu0 %v327
    %653 = vmatpush.bf16.msra.mxu0 %v323
    %654 = vmatpush.bf16.msra.mxu0 %v319
    %655 = vmatpush.bf16.msra.mxu0 %v315
    %656 = vmatpush.bf16.msra.mxu0 %v311
    %657 = vmatpush.bf16.msra.mxu0 %v307
    %658 = vmatpush.bf16.msra.mxu0 %v303
    %659 = vmatpush.bf16.msra.mxu0 %v299
    %660 = vmatmul.bf16.gmra.mxu0 %v598
    %v661 = vpop.f32.mrf.mxu0
    %v662 = vadd.f32 %v99, %v661
    %v663 = vpop.f32.mrf.mxu0
    %664 = vdwg.mxu0
    %665 = vmatpush.bf16.msra.mxu0 %v359
    %666 = vmatpush.bf16.msra.mxu0 %v355
    %667 = vmatpush.bf16.msra.mxu0 %v351
    %668 = vmatpush.bf16.msra.mxu0 %v347
    %669 = vmatpush.bf16.msra.mxu0 %v343
    %670 = vmatpush.bf16.msra.mxu0 %v339
    %671 = vmatpush.bf16.msra.mxu0 %v335
    %672 = vmatpush.bf16.msra.mxu0 %v331
    %673 = vmatmul.bf16.gmra.mxu0 %v599
    %v674 = vpop.f32.mrf.mxu0
    %v675 = vadd.f32 %v662, %v674
    %v676 = vpop.f32.mrf.mxu0
    %677 = vdwg.mxu0
    %678 = vmatpush.bf16.msra.mxu0 %v328
    %679 = vmatpush.bf16.msra.mxu0 %v324
    %680 = vmatpush.bf16.msra.mxu0 %v320
    %681 = vmatpush.bf16.msra.mxu0 %v316
    %682 = vmatpush.bf16.msra.mxu0 %v312
    %683 = vmatpush.bf16.msra.mxu0 %v308
    %684 = vmatpush.bf16.msra.mxu0 %v304
    %685 = vmatpush.bf16.msra.mxu0 %v300
    %686 = vmatmul.bf16.gmra.mxu0 %v598
    %v687 = vpop.f32.mrf.mxu0
    %v688 = vadd.f32 %v100, %v687
    %v689 = vpop.f32.mrf.mxu0
    %690 = vdwg.mxu0
    %691 = vmatpush.bf16.msra.mxu0 %v360
    %692 = vmatpush.bf16.msra.mxu0 %v356
    %693 = vmatpush.bf16.msra.mxu0 %v352
    %694 = vmatpush.bf16.msra.mxu0 %v348
    %695 = vmatpush.bf16.msra.mxu0 %v344
    %696 = vmatpush.bf16.msra.mxu0 %v340
    %697 = vmatpush.bf16.msra.mxu0 %v336
    %698 = vmatpush.bf16.msra.mxu0 %v332
    %699 = vmatmul.bf16.gmra.mxu0 %v599
    %v700 = vpop.f32.mrf.mxu0
    %v701 = vadd.f32 %v688, %v700
    %v702 = vpop.f32.mrf.mxu0
    %703 = vdwg.mxu0
    %v704 = vxor.u32 %v623, 2147483648
    %v705 = vxor.u32 %v649, 2147483648
    %v706 = vxor.u32 %v675, 2147483648
    %v707 = vmul.f32 %v704, 1.442695
    %v708 = vpow.pop %v707
    %v709 = vmul.f32 %v705, 1.442695
    %v710 = vpow.pop %v709
    %v711 = vmul.f32 %v706, 1.442695
    %v712 = vpow.pop %v711
    %v713 = vadd.f32 %v708, 1.0
    %v714 = vadd.f32 %v710, 1.0
    %v715 = vadd.f32 %v712, 1.0
    %v716 = vrcp.pop %v713
    %v717 = vmul.f32 %v713, %v716
    %v718 = vsub.f32 1.0, %v717
    %v719 = vmul.f32 %v716, %v718
    %v720 = vadd.f32 %v716, %v719
    %vm721 = vweird.f32 %v713
    %vm722 = vweird.f32 %v716
    %vm723 = vmor %vm721, %vm722
    %v724 = vsel %vm723, %v716, %v720
    %v725 = vand.u32 2147483647, %v713
    %vm726 = vcmp.eq.f32.partialorder %v725, 8.507059e+37
    %v727 = vand.u32 %v713, 2147483648
    %v728 = vor.u32 1.1754944e-38, %v727
    %v729 = vsel %vm726, %v728, %v724
    %v730 = vmul.f32 1.0, %v729
    %v731 = vrcp.pop %v714
    %v732 = vmul.f32 %v714, %v731
    %v733 = vsub.f32 1.0, %v732
    %v734 = vmul.f32 %v731, %v733
    %v735 = vadd.f32 %v731, %v734
    %vm736 = vweird.f32 %v714
    %vm737 = vweird.f32 %v731
    %vm738 = vmor %vm736, %vm737
    %v739 = vsel %vm738, %v731, %v735
    %v740 = vand.u32 2147483647, %v714
    %vm741 = vcmp.eq.f32.partialorder %v740, 8.507059e+37
    %v742 = vand.u32 %v714, 2147483648
    %v743 = vor.u32 1.1754944e-38, %v742
    %v744 = vsel %vm741, %v743, %v739
    %v745 = vmul.f32 1.0, %v744
    %v746 = vrcp.pop %v715
    %v747 = vmul.f32 %v715, %v746
    %v748 = vsub.f32 1.0, %v747
    %v749 = vmul.f32 %v746, %v748
    %v750 = vadd.f32 %v746, %v749
    %vm751 = vweird.f32 %v715
    %vm752 = vweird.f32 %v746
    %vm753 = vmor %vm751, %vm752
    %v754 = vsel %vm753, %v746, %v750
    %v755 = vand.u32 2147483647, %v715
    %vm756 = vcmp.eq.f32.partialorder %v755, 8.507059e+37
    %v757 = vand.u32 %v715, 2147483648
    %v758 = vor.u32 1.1754944e-38, %v757
    %v759 = vsel %vm756, %v758, %v754
    %v760 = vmul.f32 1.0, %v759
    %v761 = vtanh.pop %v701
    %v762 = vmul.f32 %v745, %v596
    %v763 = vmul.f32 %v730, %v761
    %v764 = vadd.f32 %v762, %v763
    %v765 = vtanh.pop %v764
    %v766 = vmul.f32 %v760, %v765
    %767 = vst [vmem:[#allocation3] sm:$0xff] %v764
    %768 = vst [vmem:[#allocation2] sm:$0xff] %v766
    %s769 = scalar_lea.vmem [#allocation4], 8
    %770 = vst [vmem:[%s769] sm:$0xff] %v766
    %v771 = vld [vmem:[#allocation2] sm:$0xff]
    %v772 = vld [vmem:[#allocation3] sm:$0xff]
    %s773 = scalar_lea.vmem %s0, 8
    %v774 = vld [vmem:[%s773] sm:$0xf]
    %v775 = vpack.c.bf16 %v771, %v771
    %776 = vmatpush.bf16.msra.mxu0 %v325
    %777 = vmatpush.bf16.msra.mxu0 %v321
    %778 = vmatpush.bf16.msra.mxu0 %v317
    %779 = vmatpush.bf16.msra.mxu0 %v313
    %780 = vmatpush.bf16.msra.mxu0 %v309
    %781 = vmatpush.bf16.msra.mxu0 %v305
    %782 = vmatpush.bf16.msra.mxu0 %v301
    %783 = vmatpush.bf16.msra.mxu0 %v297
    %784 = vmatmul.bf16.gmra.mxu0 %v774
    %v785 = vpop.f32.mrf.mxu0
    %v786 = vadd.f32 %v97, %v785
    %v787 = vpop.f32.mrf.mxu0
    %788 = vdwg.mxu0
    %789 = vmatpush.bf16.msra.mxu0 %v357
    %790 = vmatpush.bf16.msra.mxu0 %v353
    %791 = vmatpush.bf16.msra.mxu0 %v349
    %792 = vmatpush.bf16.msra.mxu0 %v345
    %793 = vmatpush.bf16.msra.mxu0 %v341
    %794 = vmatpush.bf16.msra.mxu0 %v337
    %795 = vmatpush.bf16.msra.mxu0 %v333
    %796 = vmatpush.bf16.msra.mxu0 %v329
    %797 = vmatmul.bf16.gmra.mxu0 %v775
    %v798 = vpop.f32.mrf.mxu0
    %v799 = vadd.f32 %v786, %v798
    %v800 = vpop.f32.mrf.mxu0
    %801 = vdwg.mxu0
    %802 = vmatpush.bf16.msra.mxu0 %v326
    %803 = vmatpush.bf16.msra.mxu0 %v322
    %804 = vmatpush.bf16.msra.mxu0 %v318
    %805 = vmatpush.bf16.msra.mxu0 %v314
    %806 = vmatpush.bf16.msra.mxu0 %v310
    %807 = vmatpush.bf16.msra.mxu0 %v306
    %808 = vmatpush.bf16.msra.mxu0 %v302
    %809 = vmatpush.bf16.msra.mxu0 %v298
    %810 = vmatmul.bf16.gmra.mxu0 %v774
    %v811 = vpop.f32.mrf.mxu0
    %v812 = vadd.f32 %v98, %v811
    %v813 = vpop.f32.mrf.mxu0
    %814 = vdwg.mxu0
    %815 = vmatpush.bf16.msra.mxu0 %v358
    %816 = vmatpush.bf16.msra.mxu0 %v354
    %817 = vmatpush.bf16.msra.mxu0 %v350
    %818 = vmatpush.bf16.msra.mxu0 %v346
    %819 = vmatpush.bf16.msra.mxu0 %v342
    %820 = vmatpush.bf16.msra.mxu0 %v338
    %821 = vmatpush.bf16.msra.mxu0 %v334
    %822 = vmatpush.bf16.msra.mxu0 %v330
    %823 = vmatmul.bf16.gmra.mxu0 %v775
    %v824 = vpop.f32.mrf.mxu0
    %v825 = vadd.f32 %v812, %v824
    %v826 = vpop.f32.mrf.mxu0
    %827 = vdwg.mxu0
    %828 = vmatpush.bf16.msra.mxu0 %v327
    %829 = vmatpush.bf16.msra.mxu0 %v323
    %830 = vmatpush.bf16.msra.mxu0 %v319
    %831 = vmatpush.bf16.msra.mxu0 %v315
    %832 = vmatpush.bf16.msra.mxu0 %v311
    %833 = vmatpush.bf16.msra.mxu0 %v307
    %834 = vmatpush.bf16.msra.mxu0 %v303
    %835 = vmatpush.bf16.msra.mxu0 %v299
    %836 = vmatmul.bf16.gmra.mxu0 %v774
    %v837 = vpop.f32.mrf.mxu0
    %v838 = vadd.f32 %v99, %v837
    %v839 = vpop.f32.mrf.mxu0
    %840 = vdwg.mxu0
    %841 = vmatpush.bf16.msra.mxu0 %v359
    %842 = vmatpush.bf16.msra.mxu0 %v355
    %843 = vmatpush.bf16.msra.mxu0 %v351
    %844 = vmatpush.bf16.msra.mxu0 %v347
    %845 = vmatpush.bf16.msra.mxu0 %v343
    %846 = vmatpush.bf16.msra.mxu0 %v339
    %847 = vmatpush.bf16.msra.mxu0 %v335
    %848 = vmatpush.bf16.msra.mxu0 %v331
    %849 = vmatmul.bf16.gmra.mxu0 %v775
    %v850 = vpop.f32.mrf.mxu0
    %v851 = vadd.f32 %v838, %v850
    %v852 = vpop.f32.mrf.mxu0
    %853 = vdwg.mxu0
    %854 = vmatpush.bf16.msra.mxu0 %v328
    %855 = vmatpush.bf16.msra.mxu0 %v324
    %856 = vmatpush.bf16.msra.mxu0 %v320
    %857 = vmatpush.bf16.msra.mxu0 %v316
    %858 = vmatpush.bf16.msra.mxu0 %v312
    %859 = vmatpush.bf16.msra.mxu0 %v308
    %860 = vmatpush.bf16.msra.mxu0 %v304
    %861 = vmatpush.bf16.msra.mxu0 %v300
    %862 = vmatmul.bf16.gmra.mxu0 %v774
    %v863 = vpop.f32.mrf.mxu0
    %v864 = vadd.f32 %v100, %v863
    %v865 = vpop.f32.mrf.mxu0
    %866 = vdwg.mxu0
    %867 = vmatpush.bf16.msra.mxu0 %v360
    %868 = vmatpush.bf16.msra.mxu0 %v356
    %869 = vmatpush.bf16.msra.mxu0 %v352
    %870 = vmatpush.bf16.msra.mxu0 %v348
    %871 = vmatpush.bf16.msra.mxu0 %v344
    %872 = vmatpush.bf16.msra.mxu0 %v340
    %873 = vmatpush.bf16.msra.mxu0 %v336
    %874 = vmatpush.bf16.msra.mxu0 %v332
    %875 = vmatmul.bf16.gmra.mxu0 %v775
    %v876 = vpop.f32.mrf.mxu0
    %v877 = vadd.f32 %v864, %v876
    %v878 = vpop.f32.mrf.mxu0
    %879 = vdwg.mxu0
    %v880 = vxor.u32 %v799, 2147483648
    %v881 = vxor.u32 %v825, 2147483648
    %v882 = vxor.u32 %v851, 2147483648
    %v883 = vmul.f32 %v880, 1.442695
    %v884 = vpow.pop %v883
    %v885 = vmul.f32 %v881, 1.442695
    %v886 = vpow.pop %v885
    %v887 = vmul.f32 %v882, 1.442695
    %v888 = vpow.pop %v887
    %v889 = vadd.f32 %v884, 1.0
    %v890 = vadd.f32 %v886, 1.0
    %v891 = vadd.f32 %v888, 1.0
    %v892 = vrcp.pop %v889
    %v893 = vmul.f32 %v889, %v892
    %v894 = vsub.f32 1.0, %v893
    %v895 = vmul.f32 %v892, %v894
    %v896 = vadd.f32 %v892, %v895
    %vm897 = vweird.f32 %v889
    %vm898 = vweird.f32 %v892
    %vm899 = vmor %vm897, %vm898
    %v900 = vsel %vm899, %v892, %v896
    %v901 = vand.u32 2147483647, %v889
    %vm902 = vcmp.eq.f32.partialorder %v901, 8.507059e+37
    %v903 = vand.u32 %v889, 2147483648
    %v904 = vor.u32 1.1754944e-38, %v903
    %v905 = vsel %vm902, %v904, %v900
    %v906 = vmul.f32 1.0, %v905
    %v907 = vrcp.pop %v890
    %v908 = vmul.f32 %v890, %v907
    %v909 = vsub.f32 1.0, %v908
    %v910 = vmul.f32 %v907, %v909
    %v911 = vadd.f32 %v907, %v910
    %vm912 = vweird.f32 %v890
    %vm913 = vweird.f32 %v907
    %vm914 = vmor %vm912, %vm913
    %v915 = vsel %vm914, %v907, %v911
    %v916 = vand.u32 2147483647, %v890
    %vm917 = vcmp.eq.f32.partialorder %v916, 8.507059e+37
    %v918 = vand.u32 %v890, 2147483648
    %v919 = vor.u32 1.1754944e-38, %v918
    %v920 = vsel %vm917, %v919, %v915
    %v921 = vmul.f32 1.0, %v920
    %v922 = vrcp.pop %v891
    %v923 = vmul.f32 %v891, %v922
    %v924 = vsub.f32 1.0, %v923
    %v925 = vmul.f32 %v922, %v924
    %v926 = vadd.f32 %v922, %v925
    %vm927 = vweird.f32 %v891
    %vm928 = vweird.f32 %v922
    %vm929 = vmor %vm927, %vm928
    %v930 = vsel %vm929, %v922, %v926
    %v931 = vand.u32 2147483647, %v891
    %vm932 = vcmp.eq.f32.partialorder %v931, 8.507059e+37
    %v933 = vand.u32 %v891, 2147483648
    %v934 = vor.u32 1.1754944e-38, %v933
    %v935 = vsel %vm932, %v934, %v930
    %v936 = vmul.f32 1.0, %v935
    %v937 = vtanh.pop %v877
    %v938 = vmul.f32 %v921, %v772
    %v939 = vmul.f32 %v906, %v937
    %v940 = vadd.f32 %v938, %v939
    %v941 = vtanh.pop %v940
    %v942 = vmul.f32 %v936, %v941
    %943 = vst [vmem:[#allocation3] sm:$0xff] %v940
    %944 = vst [vmem:[#allocation2] sm:$0xff] %v942
    %s945 = scalar_lea.vmem [#allocation4], 16
    %946 = vst [vmem:[%s945] sm:$0xff] %v942
    %v947 = vld [vmem:[#allocation2] sm:$0xff]
    %v948 = vld [vmem:[#allocation3] sm:$0xff]
    %s949 = scalar_lea.vmem %s0, 12
    %v950 = vld [vmem:[%s949] sm:$0xf]
    %v951 = vpack.c.bf16 %v947, %v947
    %952 = vmatpush.bf16.msra.mxu0 %v325
    %953 = vmatpush.bf16.msra.mxu0 %v321
    %954 = vmatpush.bf16.msra.mxu0 %v317
    %955 = vmatpush.bf16.msra.mxu0 %v313
    %956 = vmatpush.bf16.msra.mxu0 %v309
    %957 = vmatpush.bf16.msra.mxu0 %v305
    %958 = vmatpush.bf16.msra.mxu0 %v301
    %959 = vmatpush.bf16.msra.mxu0 %v297
    %960 = vmatmul.bf16.gmra.mxu0 %v950
    %v961 = vpop.f32.mrf.mxu0
    %v962 = vadd.f32 %v97, %v961
    %v963 = vpop.f32.mrf.mxu0
    %964 = vdwg.mxu0
    %965 = vmatpush.bf16.msra.mxu0 %v357
    %966 = vmatpush.bf16.msra.mxu0 %v353
    %967 = vmatpush.bf16.msra.mxu0 %v349
    %968 = vmatpush.bf16.msra.mxu0 %v345
    %969 = vmatpush.bf16.msra.mxu0 %v341
    %970 = vmatpush.bf16.msra.mxu0 %v337
    %971 = vmatpush.bf16.msra.mxu0 %v333
    %972 = vmatpush.bf16.msra.mxu0 %v329
    %973 = vmatmul.bf16.gmra.mxu0 %v951
    %v974 = vpop.f32.mrf.mxu0
    %v975 = vadd.f32 %v962, %v974
    %v976 = vpop.f32.mrf.mxu0
    %977 = vdwg.mxu0
    %978 = vmatpush.bf16.msra.mxu0 %v326
    %979 = vmatpush.bf16.msra.mxu0 %v322
    %980 = vmatpush.bf16.msra.mxu0 %v318
    %981 = vmatpush.bf16.msra.mxu0 %v314
    %982 = vmatpush.bf16.msra.mxu0 %v310
    %983 = vmatpush.bf16.msra.mxu0 %v306
    %984 = vmatpush.bf16.msra.mxu0 %v302
    %985 = vmatpush.bf16.msra.mxu0 %v298
    %986 = vmatmul.bf16.gmra.mxu0 %v950
    %v987 = vpop.f32.mrf.mxu0
    %v988 = vadd.f32 %v98, %v987
    %v989 = vpop.f32.mrf.mxu0
    %990 = vdwg.mxu0
    %991 = vmatpush.bf16.msra.mxu0 %v358
    %992 = vmatpush.bf16.msra.mxu0 %v354
    %993 = vmatpush.bf16.msra.mxu0 %v350
    %994 = vmatpush.bf16.msra.mxu0 %v346
    %995 = vmatpush.bf16.msra.mxu0 %v342
    %996 = vmatpush.bf16.msra.mxu0 %v338
    %997 = vmatpush.bf16.msra.mxu0 %v334
    %998 = vmatpush.bf16.msra.mxu0 %v330
    %999 = vmatmul.bf16.gmra.mxu0 %v951
    %v1000 = vpop.f32.mrf.mxu0
    %v1001 = vadd.f32 %v988, %v1000
    %v1002 = vpop.f32.mrf.mxu0
    %1003 = vdwg.mxu0
    %1004 = vmatpush.bf16.msra.mxu0 %v327
    %1005 = vmatpush.bf16.msra.mxu0 %v323
    %1006 = vmatpush.bf16.msra.mxu0 %v319
    %1007 = vmatpush.bf16.msra.mxu0 %v315
    %1008 = vmatpush.bf16.msra.mxu0 %v311
    %1009 = vmatpush.bf16.msra.mxu0 %v307
    %1010 = vmatpush.bf16.msra.mxu0 %v303
    %1011 = vmatpush.bf16.msra.mxu0 %v299
    %1012 = vmatmul.bf16.gmra.mxu0 %v950
    %v1013 = vpop.f32.mrf.mxu0
    %v1014 = vadd.f32 %v99, %v1013
    %v1015 = vpop.f32.mrf.mxu0
    %1016 = vdwg.mxu0
    %1017 = vmatpush.bf16.msra.mxu0 %v359
    %1018 = vmatpush.bf16.msra.mxu0 %v355
    %1019 = vmatpush.bf16.msra.mxu0 %v351
    %1020 = vmatpush.bf16.msra.mxu0 %v347
    %1021 = vmatpush.bf16.msra.mxu0 %v343
    %1022 = vmatpush.bf16.msra.mxu0 %v339
    %1023 = vmatpush.bf16.msra.mxu0 %v335
    %1024 = vmatpush.bf16.msra.mxu0 %v331
    %1025 = vmatmul.bf16.gmra.mxu0 %v951
    %v1026 = vpop.f32.mrf.mxu0
    %v1027 = vadd.f32 %v1014, %v1026
    %v1028 = vpop.f32.mrf.mxu0
    %1029 = vdwg.mxu0
    %1030 = vmatpush.bf16.msra.mxu0 %v328
    %1031 = vmatpush.bf16.msra.mxu0 %v324
    %1032 = vmatpush.bf16.msra.mxu0 %v320
    %1033 = vmatpush.bf16.msra.mxu0 %v316
    %1034 = vmatpush.bf16.msra.mxu0 %v312
    %1035 = vmatpush.bf16.msra.mxu0 %v308
    %1036 = vmatpush.bf16.msra.mxu0 %v304
    %1037 = vmatpush.bf16.msra.mxu0 %v300
    %1038 = vmatmul.bf16.gmra.mxu0 %v950
    %v1039 = vpop.f32.mrf.mxu0
    %v1040 = vadd.f32 %v100, %v1039
    %v1041 = vpop.f32.mrf.mxu0
    %1042 = vdwg.mxu0
    %1043 = vmatpush.bf16.msra.mxu0 %v360
    %1044 = vmatpush.bf16.msra.mxu0 %v356
    %1045 = vmatpush.bf16.msra.mxu0 %v352
    %1046 = vmatpush.bf16.msra.mxu0 %v348
    %1047 = vmatpush.bf16.msra.mxu0 %v344
    %1048 = vmatpush.bf16.msra.mxu0 %v340
    %1049 = vmatpush.bf16.msra.mxu0 %v336
    %1050 = vmatpush.bf16.msra.mxu0 %v332
    %1051 = vmatmul.bf16.gmra.mxu0 %v951
    %v1052 = vpop.f32.mrf.mxu0
    %v1053 = vadd.f32 %v1040, %v1052
    %v1054 = vpop.f32.mrf.mxu0
    %1055 = vdwg.mxu0
    %v1056 = vxor.u32 %v975, 2147483648
    %v1057 = vxor.u32 %v1001, 2147483648
    %v1058 = vxor.u32 %v1027, 2147483648
    %v1059 = vmul.f32 %v1056, 1.442695
    %v1060 = vpow.pop %v1059
    %v1061 = vmul.f32 %v1057, 1.442695
    %v1062 = vpow.pop %v1061
    %v1063 = vmul.f32 %v1058, 1.442695
    %v1064 = vpow.pop %v1063
    %v1065 = vadd.f32 %v1060, 1.0
    %v1066 = vadd.f32 %v1062, 1.0
    %v1067 = vadd.f32 %v1064, 1.0
    %v1068 = vrcp.pop %v1065
    %v1069 = vmul.f32 %v1065, %v1068
    %v1070 = vsub.f32 1.0, %v1069
    %v1071 = vmul.f32 %v1068, %v1070
    %v1072 = vadd.f32 %v1068, %v1071
    %vm1073 = vweird.f32 %v1065
    %vm1074 = vweird.f32 %v1068
    %vm1075 = vmor %vm1073, %vm1074
    %v1076 = vsel %vm1075, %v1068, %v1072
    %v1077 = vand.u32 2147483647, %v1065
    %vm1078 = vcmp.eq.f32.partialorder %v1077, 8.507059e+37
    %v1079 = vand.u32 %v1065, 2147483648
    %v1080 = vor.u32 1.1754944e-38, %v1079
    %v1081 = vsel %vm1078, %v1080, %v1076
    %v1082 = vmul.f32 1.0, %v1081
    %v1083 = vrcp.pop %v1066
    %v1084 = vmul.f32 %v1066, %v1083
    %v1085 = vsub.f32 1.0, %v1084
    %v1086 = vmul.f32 %v1083, %v1085
    %v1087 = vadd.f32 %v1083, %v1086
    %vm1088 = vweird.f32 %v1066
    %vm1089 = vweird.f32 %v1083
    %vm1090 = vmor %vm1088, %vm1089
    %v1091 = vsel %vm1090, %v1083, %v1087
    %v1092 = vand.u32 2147483647, %v1066
    %vm1093 = vcmp.eq.f32.partialorder %v1092, 8.507059e+37
    %v1094 = vand.u32 %v1066, 2147483648
    %v1095 = vor.u32 1.1754944e-38, %v1094
    %v1096 = vsel %vm1093, %v1095, %v1091
    %v1097 = vmul.f32 1.0, %v1096
    %v1098 = vrcp.pop %v1067
    %v1099 = vmul.f32 %v1067, %v1098
    %v1100 = vsub.f32 1.0, %v1099
    %v1101 = vmul.f32 %v1098, %v1100
    %v1102 = vadd.f32 %v1098, %v1101
    %vm1103 = vweird.f32 %v1067
    %vm1104 = vweird.f32 %v1098
    %vm1105 = vmor %vm1103, %vm1104
    %v1106 = vsel %vm1105, %v1098, %v1102
    %v1107 = vand.u32 2147483647, %v1067
    %vm1108 = vcmp.eq.f32.partialorder %v1107, 8.507059e+37
    %v1109 = vand.u32 %v1067, 2147483648
    %v1110 = vor.u32 1.1754944e-38, %v1109
    %v1111 = vsel %vm1108, %v1110, %v1106
    %v1112 = vmul.f32 1.0, %v1111
    %v1113 = vtanh.pop %v1053
    %v1114 = vmul.f32 %v1097, %v948
    %v1115 = vmul.f32 %v1082, %v1113
    %v1116 = vadd.f32 %v1114, %v1115
    %v1117 = vtanh.pop %v1116
    %v1118 = vmul.f32 %v1112, %v1117
    %1119 = vst [vmem:[#allocation3] sm:$0xff] %v1116
    %1120 = vst [vmem:[#allocation2] sm:$0xff] %v1118
    %s1121 = scalar_lea.vmem [#allocation4], 24
    %1122 = vst [vmem:[%s1121] sm:$0xff] %v1118
    %v1123 = vld [vmem:[#allocation2] sm:$0xff]
    %v1124 = vld [vmem:[#allocation3] sm:$0xff]
    %s1125 = scalar_lea.vmem %s0, 16
    %v1126 = vld [vmem:[%s1125] sm:$0xf]
    %v1127 = vpack.c.bf16 %v1123, %v1123
    %1128 = vmatpush.bf16.msra.mxu0 %v325
    %1129 = vmatpush.bf16.msra.mxu0 %v321
    %1130 = vmatpush.bf16.msra.mxu0 %v317
    %1131 = vmatpush.bf16.msra.mxu0 %v313
    %1132 = vmatpush.bf16.msra.mxu0 %v309
    %1133 = vmatpush.bf16.msra.mxu0 %v305
    %1134 = vmatpush.bf16.msra.mxu0 %v301
    %1135 = vmatpush.bf16.msra.mxu0 %v297
    %1136 = vmatmul.bf16.gmra.mxu0 %v1126
    %v1137 = vpop.f32.mrf.mxu0
    %v1138 = vadd.f32 %v97, %v1137
    %v1139 = vpop.f32.mrf.mxu0
    %1140 = vdwg.mxu0
    %1141 = vmatpush.bf16.msra.mxu0 %v357
    %1142 = vmatpush.bf16.msra.mxu0 %v353
    %1143 = vmatpush.bf16.msra.mxu0 %v349
    %1144 = vmatpush.bf16.msra.mxu0 %v345
    %1145 = vmatpush.bf16.msra.mxu0 %v341
    %1146 = vmatpush.bf16.msra.mxu0 %v337
    %1147 = vmatpush.bf16.msra.mxu0 %v333
    %1148 = vmatpush.bf16.msra.mxu0 %v329
    %1149 = vmatmul.bf16.gmra.mxu0 %v1127
    %v1150 = vpop.f32.mrf.mxu0
    %v1151 = vadd.f32 %v1138, %v1150
    %v1152 = vpop.f32.mrf.mxu0
    %1153 = vdwg.mxu0
    %1154 = vmatpush.bf16.msra.mxu0 %v326
    %1155 = vmatpush.bf16.msra.mxu0 %v322
    %1156 = vmatpush.bf16.msra.mxu0 %v318
    %1157 = vmatpush.bf16.msra.mxu0 %v314
    %1158 = vmatpush.bf16.msra.mxu0 %v310
    %1159 = vmatpush.bf16.msra.mxu0 %v306
    %1160 = vmatpush.bf16.msra.mxu0 %v302
    %1161 = vmatpush.bf16.msra.mxu0 %v298
    %1162 = vmatmul.bf16.gmra.mxu0 %v1126
    %v1163 = vpop.f32.mrf.mxu0
    %v1164 = vadd.f32 %v98, %v1163
    %v1165 = vpop.f32.mrf.mxu0
    %1166 = vdwg.mxu0
    %1167 = vmatpush.bf16.msra.mxu0 %v358
    %1168 = vmatpush.bf16.msra.mxu0 %v354
    %1169 = vmatpush.bf16.msra.mxu0 %v350
    %1170 = vmatpush.bf16.msra.mxu0 %v346
    %1171 = vmatpush.bf16.msra.mxu0 %v342
    %1172 = vmatpush.bf16.msra.mxu0 %v338
    %1173 = vmatpush.bf16.msra.mxu0 %v334
    %1174 = vmatpush.bf16.msra.mxu0 %v330
    %1175 = vmatmul.bf16.gmra.mxu0 %v1127
    %v1176 = vpop.f32.mrf.mxu0
    %v1177 = vadd.f32 %v1164, %v1176
    %v1178 = vpop.f32.mrf.mxu0
    %1179 = vdwg.mxu0
    %1180 = vmatpush.bf16.msra.mxu0 %v327
    %1181 = vmatpush.bf16.msra.mxu0 %v323
    %1182 = vmatpush.bf16.msra.mxu0 %v319
    %1183 = vmatpush.bf16.msra.mxu0 %v315
    %1184 = vmatpush.bf16.msra.mxu0 %v311
    %1185 = vmatpush.bf16.msra.mxu0 %v307
    %1186 = vmatpush.bf16.msra.mxu0 %v303
    %1187 = vmatpush.bf16.msra.mxu0 %v299
    %1188 = vmatmul.bf16.gmra.mxu0 %v1126
    %v1189 = vpop.f32.mrf.mxu0
    %v1190 = vadd.f32 %v99, %v1189
    %v1191 = vpop.f32.mrf.mxu0
    %1192 = vdwg.mxu0
    %1193 = vmatpush.bf16.msra.mxu0 %v359
    %1194 = vmatpush.bf16.msra.mxu0 %v355
    %1195 = vmatpush.bf16.msra.mxu0 %v351
    %1196 = vmatpush.bf16.msra.mxu0 %v347
    %1197 = vmatpush.bf16.msra.mxu0 %v343
    %1198 = vmatpush.bf16.msra.mxu0 %v339
    %1199 = vmatpush.bf16.msra.mxu0 %v335
    %1200 = vmatpush.bf16.msra.mxu0 %v331
    %1201 = vmatmul.bf16.gmra.mxu0 %v1127
    %v1202 = vpop.f32.mrf.mxu0
    %v1203 = vadd.f32 %v1190, %v1202
    %v1204 = vpop.f32.mrf.mxu0
    %1205 = vdwg.mxu0
    %1206 = vmatpush.bf16.msra.mxu0 %v328
    %1207 = vmatpush.bf16.msra.mxu0 %v324
    %1208 = vmatpush.bf16.msra.mxu0 %v320
    %1209 = vmatpush.bf16.msra.mxu0 %v316
    %1210 = vmatpush.bf16.msra.mxu0 %v312
    %1211 = vmatpush.bf16.msra.mxu0 %v308
    %1212 = vmatpush.bf16.msra.mxu0 %v304
    %1213 = vmatpush.bf16.msra.mxu0 %v300
    %1214 = vmatmul.bf16.gmra.mxu0 %v1126
    %v1215 = vpop.f32.mrf.mxu0
    %v1216 = vadd.f32 %v100, %v1215
    %v1217 = vpop.f32.mrf.mxu0
    %1218 = vdwg.mxu0
    %1219 = vmatpush.bf16.msra.mxu0 %v360
    %1220 = vmatpush.bf16.msra.mxu0 %v356
    %1221 = vmatpush.bf16.msra.mxu0 %v352
    %1222 = vmatpush.bf16.msra.mxu0 %v348
    %1223 = vmatpush.bf16.msra.mxu0 %v344
    %1224 = vmatpush.bf16.msra.mxu0 %v340
    %1225 = vmatpush.bf16.msra.mxu0 %v336
    %1226 = vmatpush.bf16.msra.mxu0 %v332
    %1227 = vmatmul.bf16.gmra.mxu0 %v1127
    %v1228 = vpop.f32.mrf.mxu0
    %v1229 = vadd.f32 %v1216, %v1228
    %v1230 = vpop.f32.mrf.mxu0
    %1231 = vdwg.mxu0
    %v1232 = vxor.u32 %v1151, 2147483648
    %v1233 = vxor.u32 %v1177, 2147483648
    %v1234 = vxor.u32 %v1203, 2147483648
    %v1235 = vmul.f32 %v1232, 1.442695
    %v1236 = vpow.pop %v1235
    %v1237 = vmul.f32 %v1233, 1.442695
    %v1238 = vpow.pop %v1237
    %v1239 = vmul.f32 %v1234, 1.442695
    %v1240 = vpow.pop %v1239
    %v1241 = vadd.f32 %v1236, 1.0
    %v1242 = vadd.f32 %v1238, 1.0
    %v1243 = vadd.f32 %v1240, 1.0
    %v1244 = vrcp.pop %v1241
    %v1245 = vmul.f32 %v1241, %v1244
    %v1246 = vsub.f32 1.0, %v1245
    %v1247 = vmul.f32 %v1244, %v1246
    %v1248 = vadd.f32 %v1244, %v1247
    %vm1249 = vweird.f32 %v1241
    %vm1250 = vweird.f32 %v1244
    %vm1251 = vmor %vm1249, %vm1250
    %v1252 = vsel %vm1251, %v1244, %v1248
    %v1253 = vand.u32 2147483647, %v1241
    %vm1254 = vcmp.eq.f32.partialorder %v1253, 8.507059e+37
    %v1255 = vand.u32 %v1241, 2147483648
    %v1256 = vor.u32 1.1754944e-38, %v1255
    %v1257 = vsel %vm1254, %v1256, %v1252
    %v1258 = vmul.f32 1.0, %v1257
    %v1259 = vrcp.pop %v1242
    %v1260 = vmul.f32 %v1242, %v1259
    %v1261 = vsub.f32 1.0, %v1260
    %v1262 = vmul.f32 %v1259, %v1261
    %v1263 = vadd.f32 %v1259, %v1262
    %vm1264 = vweird.f32 %v1242
    %vm1265 = vweird.f32 %v1259
    %vm1266 = vmor %vm1264, %vm1265
    %v1267 = vsel %vm1266, %v1259, %v1263
    %v1268 = vand.u32 2147483647, %v1242
    %vm1269 = vcmp.eq.f32.partialorder %v1268, 8.507059e+37
    %v1270 = vand.u32 %v1242, 2147483648
    %v1271 = vor.u32 1.1754944e-38, %v1270
    %v1272 = vsel %vm1269, %v1271, %v1267
    %v1273 = vmul.f32 1.0, %v1272
    %v1274 = vrcp.pop %v1243
    %v1275 = vmul.f32 %v1243, %v1274
    %v1276 = vsub.f32 1.0, %v1275
    %v1277 = vmul.f32 %v1274, %v1276
    %v1278 = vadd.f32 %v1274, %v1277
    %vm1279 = vweird.f32 %v1243
    %vm1280 = vweird.f32 %v1274
    %vm1281 = vmor %vm1279, %vm1280
    %v1282 = vsel %vm1281, %v1274, %v1278
    %v1283 = vand.u32 2147483647, %v1243
    %vm1284 = vcmp.eq.f32.partialorder %v1283, 8.507059e+37
    %v1285 = vand.u32 %v1243, 2147483648
    %v1286 = vor.u32 1.1754944e-38, %v1285
    %v1287 = vsel %vm1284, %v1286, %v1282
    %v1288 = vmul.f32 1.0, %v1287
    %v1289 = vtanh.pop %v1229
    %v1290 = vmul.f32 %v1273, %v1124
    %v1291 = vmul.f32 %v1258, %v1289
    %v1292 = vadd.f32 %v1290, %v1291
    %v1293 = vtanh.pop %v1292
    %v1294 = vmul.f32 %v1288, %v1293
    %1295 = vst [vmem:[#allocation3] sm:$0xff] %v1292
    %1296 = vst [vmem:[#allocation2] sm:$0xff] %v1294
    %s1297 = scalar_lea.vmem [#allocation4], 32
    %1298 = vst [vmem:[%s1297] sm:$0xff] %v1294
    %v1299 = vld [vmem:[#allocation2] sm:$0xff]
    %v1300 = vld [vmem:[#allocation3] sm:$0xff]
    %s1301 = scalar_lea.vmem %s0, 20
    %v1302 = vld [vmem:[%s1301] sm:$0xf]
    %v1303 = vpack.c.bf16 %v1299, %v1299
    %1304 = vmatpush.bf16.msra.mxu0 %v325
    %1305 = vmatpush.bf16.msra.mxu0 %v321
    %1306 = vmatpush.bf16.msra.mxu0 %v317
    %1307 = vmatpush.bf16.msra.mxu0 %v313
    %1308 = vmatpush.bf16.msra.mxu0 %v309
    %1309 = vmatpush.bf16.msra.mxu0 %v305
    %1310 = vmatpush.bf16.msra.mxu0 %v301
    %1311 = vmatpush.bf16.msra.mxu0 %v297
    %1312 = vmatmul.bf16.gmra.mxu0 %v1302
    %v1313 = vpop.f32.mrf.mxu0
    %v1314 = vadd.f32 %v97, %v1313
    %v1315 = vpop.f32.mrf.mxu0
    %1316 = vdwg.mxu0
    %1317 = vmatpush.bf16.msra.mxu0 %v357
    %1318 = vmatpush.bf16.msra.mxu0 %v353
    %1319 = vmatpush.bf16.msra.mxu0 %v349
    %1320 = vmatpush.bf16.msra.mxu0 %v345
    %1321 = vmatpush.bf16.msra.mxu0 %v341
    %1322 = vmatpush.bf16.msra.mxu0 %v337
    %1323 = vmatpush.bf16.msra.mxu0 %v333
    %1324 = vmatpush.bf16.msra.mxu0 %v329
    %1325 = vmatmul.bf16.gmra.mxu0 %v1303
    %v1326 = vpop.f32.mrf.mxu0
    %v1327 = vadd.f32 %v1314, %v1326
    %v1328 = vpop.f32.mrf.mxu0
    %1329 = vdwg.mxu0
    %1330 = vmatpush.bf16.msra.mxu0 %v326
    %1331 = vmatpush.bf16.msra.mxu0 %v322
    %1332 = vmatpush.bf16.msra.mxu0 %v318
    %1333 = vmatpush.bf16.msra.mxu0 %v314
    %1334 = vmatpush.bf16.msra.mxu0 %v310
    %1335 = vmatpush.bf16.msra.mxu0 %v306
    %1336 = vmatpush.bf16.msra.mxu0 %v302
    %1337 = vmatpush.bf16.msra.mxu0 %v298
    %1338 = vmatmul.bf16.gmra.mxu0 %v1302
    %v1339 = vpop.f32.mrf.mxu0
    %v1340 = vadd.f32 %v98, %v1339
    %v1341 = vpop.f32.mrf.mxu0
    %1342 = vdwg.mxu0
    %1343 = vmatpush.bf16.msra.mxu0 %v358
    %1344 = vmatpush.bf16.msra.mxu0 %v354
    %1345 = vmatpush.bf16.msra.mxu0 %v350
    %1346 = vmatpush.bf16.msra.mxu0 %v346
    %1347 = vmatpush.bf16.msra.mxu0 %v342
    %1348 = vmatpush.bf16.msra.mxu0 %v338
    %1349 = vmatpush.bf16.msra.mxu0 %v334
    %1350 = vmatpush.bf16.msra.mxu0 %v330
    %1351 = vmatmul.bf16.gmra.mxu0 %v1303
    %v1352 = vpop.f32.mrf.mxu0
    %v1353 = vadd.f32 %v1340, %v1352
    %v1354 = vpop.f32.mrf.mxu0
    %1355 = vdwg.mxu0
    %1356 = vmatpush.bf16.msra.mxu0 %v327
    %1357 = vmatpush.bf16.msra.mxu0 %v323
    %1358 = vmatpush.bf16.msra.mxu0 %v319
    %1359 = vmatpush.bf16.msra.mxu0 %v315
    %1360 = vmatpush.bf16.msra.mxu0 %v311
    %1361 = vmatpush.bf16.msra.mxu0 %v307
    %1362 = vmatpush.bf16.msra.mxu0 %v303
    %1363 = vmatpush.bf16.msra.mxu0 %v299
    %1364 = vmatmul.bf16.gmra.mxu0 %v1302
    %v1365 = vpop.f32.mrf.mxu0
    %v1366 = vadd.f32 %v99, %v1365
    %v1367 = vpop.f32.mrf.mxu0
    %1368 = vdwg.mxu0
    %1369 = vmatpush.bf16.msra.mxu0 %v359
    %1370 = vmatpush.bf16.msra.mxu0 %v355
    %1371 = vmatpush.bf16.msra.mxu0 %v351
    %1372 = vmatpush.bf16.msra.mxu0 %v347
    %1373 = vmatpush.bf16.msra.mxu0 %v343
    %1374 = vmatpush.bf16.msra.mxu0 %v339
    %1375 = vmatpush.bf16.msra.mxu0 %v335
    %1376 = vmatpush.bf16.msra.mxu0 %v331
    %1377 = vmatmul.bf16.gmra.mxu0 %v1303
    %v1378 = vpop.f32.mrf.mxu0
    %v1379 = vadd.f32 %v1366, %v1378
    %v1380 = vpop.f32.mrf.mxu0
    %1381 = vdwg.mxu0
    %1382 = vmatpush.bf16.msra.mxu0 %v328
    %1383 = vmatpush.bf16.msra.mxu0 %v324
    %1384 = vmatpush.bf16.msra.mxu0 %v320
    %1385 = vmatpush.bf16.msra.mxu0 %v316
    %1386 = vmatpush.bf16.msra.mxu0 %v312
    %1387 = vmatpush.bf16.msra.mxu0 %v308
    %1388 = vmatpush.bf16.msra.mxu0 %v304
    %1389 = vmatpush.bf16.msra.mxu0 %v300
    %1390 = vmatmul.bf16.gmra.mxu0 %v1302
    %v1391 = vpop.f32.mrf.mxu0
    %v1392 = vadd.f32 %v100, %v1391
    %v1393 = vpop.f32.mrf.mxu0
    %1394 = vdwg.mxu0
    %1395 = vmatpush.bf16.msra.mxu0 %v360
    %1396 = vmatpush.bf16.msra.mxu0 %v356
    %1397 = vmatpush.bf16.msra.mxu0 %v352
    %1398 = vmatpush.bf16.msra.mxu0 %v348
    %1399 = vmatpush.bf16.msra.mxu0 %v344
    %1400 = vmatpush.bf16.msra.mxu0 %v340
    %1401 = vmatpush.bf16.msra.mxu0 %v336
    %1402 = vmatpush.bf16.msra.mxu0 %v332
    %1403 = vmatmul.bf16.gmra.mxu0 %v1303
    %v1404 = vpop.f32.mrf.mxu0
    %v1405 = vadd.f32 %v1392, %v1404
    %v1406 = vpop.f32.mrf.mxu0
    %1407 = vdwg.mxu0
    %v1408 = vxor.u32 %v1327, 2147483648
    %v1409 = vxor.u32 %v1353, 2147483648
    %v1410 = vxor.u32 %v1379, 2147483648
    %v1411 = vmul.f32 %v1408, 1.442695
    %v1412 = vpow.pop %v1411
    %v1413 = vmul.f32 %v1409, 1.442695
    %v1414 = vpow.pop %v1413
    %v1415 = vmul.f32 %v1410, 1.442695
    %v1416 = vpow.pop %v1415
    %v1417 = vadd.f32 %v1412, 1.0
    %v1418 = vadd.f32 %v1414, 1.0
    %v1419 = vadd.f32 %v1416, 1.0
    %v1420 = vrcp.pop %v1417
    %v1421 = vmul.f32 %v1417, %v1420
    %v1422 = vsub.f32 1.0, %v1421
    %v1423 = vmul.f32 %v1420, %v1422
    %v1424 = vadd.f32 %v1420, %v1423
    %vm1425 = vweird.f32 %v1417
    %vm1426 = vweird.f32 %v1420
    %vm1427 = vmor %vm1425, %vm1426
    %v1428 = vsel %vm1427, %v1420, %v1424
    %v1429 = vand.u32 2147483647, %v1417
    %vm1430 = vcmp.eq.f32.partialorder %v1429, 8.507059e+37
    %v1431 = vand.u32 %v1417, 2147483648
    %v1432 = vor.u32 1.1754944e-38, %v1431
    %v1433 = vsel %vm1430, %v1432, %v1428
    %v1434 = vmul.f32 1.0, %v1433
    %v1435 = vrcp.pop %v1418
    %v1436 = vmul.f32 %v1418, %v1435
    %v1437 = vsub.f32 1.0, %v1436
    %v1438 = vmul.f32 %v1435, %v1437
    %v1439 = vadd.f32 %v1435, %v1438
    %vm1440 = vweird.f32 %v1418
    %vm1441 = vweird.f32 %v1435
    %vm1442 = vmor %vm1440, %vm1441
    %v1443 = vsel %vm1442, %v1435, %v1439
    %v1444 = vand.u32 2147483647, %v1418
    %vm1445 = vcmp.eq.f32.partialorder %v1444, 8.507059e+37
    %v1446 = vand.u32 %v1418, 2147483648
    %v1447 = vor.u32 1.1754944e-38, %v1446
    %v1448 = vsel %vm1445, %v1447, %v1443
    %v1449 = vmul.f32 1.0, %v1448
    %v1450 = vrcp.pop %v1419
    %v1451 = vmul.f32 %v1419, %v1450
    %v1452 = vsub.f32 1.0, %v1451
    %v1453 = vmul.f32 %v1450, %v1452
    %v1454 = vadd.f32 %v1450, %v1453
    %vm1455 = vweird.f32 %v1419
    %vm1456 = vweird.f32 %v1450
    %vm1457 = vmor %vm1455, %vm1456
    %v1458 = vsel %vm1457, %v1450, %v1454
    %v1459 = vand.u32 2147483647, %v1419
    %vm1460 = vcmp.eq.f32.partialorder %v1459, 8.507059e+37
    %v1461 = vand.u32 %v1419, 2147483648
    %v1462 = vor.u32 1.1754944e-38, %v1461
    %v1463 = vsel %vm1460, %v1462, %v1458
    %v1464 = vmul.f32 1.0, %v1463
    %v1465 = vtanh.pop %v1405
    %v1466 = vmul.f32 %v1449, %v1300
    %v1467 = vmul.f32 %v1434, %v1465
    %v1468 = vadd.f32 %v1466, %v1467
    %v1469 = vtanh.pop %v1468
    %v1470 = vmul.f32 %v1464, %v1469
    %1471 = vst [vmem:[#allocation3] sm:$0xff] %v1468
    %1472 = vst [vmem:[#allocation2] sm:$0xff] %v1470
    %s1473 = scalar_lea.vmem [#allocation4], 40
    %1474 = vst [vmem:[%s1473] sm:$0xff] %v1470
    %v1475 = vld [vmem:[#allocation2] sm:$0xff]
    %v1476 = vld [vmem:[#allocation3] sm:$0xff]
    %s1477 = scalar_lea.vmem %s0, 24
    %v1478 = vld [vmem:[%s1477] sm:$0xf]
    %v1479 = vpack.c.bf16 %v1475, %v1475
    %1480 = vmatpush.bf16.msra.mxu0 %v325
    %1481 = vmatpush.bf16.msra.mxu0 %v321
    %1482 = vmatpush.bf16.msra.mxu0 %v317
    %1483 = vmatpush.bf16.msra.mxu0 %v313
    %1484 = vmatpush.bf16.msra.mxu0 %v309
    %1485 = vmatpush.bf16.msra.mxu0 %v305
    %1486 = vmatpush.bf16.msra.mxu0 %v301
    %1487 = vmatpush.bf16.msra.mxu0 %v297
    %1488 = vmatmul.bf16.gmra.mxu0 %v1478
    %v1489 = vpop.f32.mrf.mxu0
    %v1490 = vadd.f32 %v97, %v1489
    %v1491 = vpop.f32.mrf.mxu0
    %1492 = vdwg.mxu0
    %1493 = vmatpush.bf16.msra.mxu0 %v357
    %1494 = vmatpush.bf16.msra.mxu0 %v353
    %1495 = vmatpush.bf16.msra.mxu0 %v349
    %1496 = vmatpush.bf16.msra.mxu0 %v345
    %1497 = vmatpush.bf16.msra.mxu0 %v341
    %1498 = vmatpush.bf16.msra.mxu0 %v337
    %1499 = vmatpush.bf16.msra.mxu0 %v333
    %1500 = vmatpush.bf16.msra.mxu0 %v329
    %1501 = vmatmul.bf16.gmra.mxu0 %v1479
    %v1502 = vpop.f32.mrf.mxu0
    %v1503 = vadd.f32 %v1490, %v1502
    %v1504 = vpop.f32.mrf.mxu0
    %1505 = vdwg.mxu0
    %1506 = vmatpush.bf16.msra.mxu0 %v326
    %1507 = vmatpush.bf16.msra.mxu0 %v322
    %1508 = vmatpush.bf16.msra.mxu0 %v318
    %1509 = vmatpush.bf16.msra.mxu0 %v314
    %1510 = vmatpush.bf16.msra.mxu0 %v310
    %1511 = vmatpush.bf16.msra.mxu0 %v306
    %1512 = vmatpush.bf16.msra.mxu0 %v302
    %1513 = vmatpush.bf16.msra.mxu0 %v298
    %1514 = vmatmul.bf16.gmra.mxu0 %v1478
    %v1515 = vpop.f32.mrf.mxu0
    %v1516 = vadd.f32 %v98, %v1515
    %v1517 = vpop.f32.mrf.mxu0
    %1518 = vdwg.mxu0
    %1519 = vmatpush.bf16.msra.mxu0 %v358
    %1520 = vmatpush.bf16.msra.mxu0 %v354
    %1521 = vmatpush.bf16.msra.mxu0 %v350
    %1522 = vmatpush.bf16.msra.mxu0 %v346
    %1523 = vmatpush.bf16.msra.mxu0 %v342
    %1524 = vmatpush.bf16.msra.mxu0 %v338
    %1525 = vmatpush.bf16.msra.mxu0 %v334
    %1526 = vmatpush.bf16.msra.mxu0 %v330
    %1527 = vmatmul.bf16.gmra.mxu0 %v1479
    %v1528 = vpop.f32.mrf.mxu0
    %v1529 = vadd.f32 %v1516, %v1528
    %v1530 = vpop.f32.mrf.mxu0
    %1531 = vdwg.mxu0
    %1532 = vmatpush.bf16.msra.mxu0 %v327
    %1533 = vmatpush.bf16.msra.mxu0 %v323
    %1534 = vmatpush.bf16.msra.mxu0 %v319
    %1535 = vmatpush.bf16.msra.mxu0 %v315
    %1536 = vmatpush.bf16.msra.mxu0 %v311
    %1537 = vmatpush.bf16.msra.mxu0 %v307
    %1538 = vmatpush.bf16.msra.mxu0 %v303
    %1539 = vmatpush.bf16.msra.mxu0 %v299
    %1540 = vmatmul.bf16.gmra.mxu0 %v1478
    %v1541 = vpop.f32.mrf.mxu0
    %v1542 = vadd.f32 %v99, %v1541
    %v1543 = vpop.f32.mrf.mxu0
    %1544 = vdwg.mxu0
    %1545 = vmatpush.bf16.msra.mxu0 %v359
    %1546 = vmatpush.bf16.msra.mxu0 %v355
    %1547 = vmatpush.bf16.msra.mxu0 %v351
    %1548 = vmatpush.bf16.msra.mxu0 %v347
    %1549 = vmatpush.bf16.msra.mxu0 %v343
    %1550 = vmatpush.bf16.msra.mxu0 %v339
    %1551 = vmatpush.bf16.msra.mxu0 %v335
    %1552 = vmatpush.bf16.msra.mxu0 %v331
    %1553 = vmatmul.bf16.gmra.mxu0 %v1479
    %v1554 = vpop.f32.mrf.mxu0
    %v1555 = vadd.f32 %v1542, %v1554
    %v1556 = vpop.f32.mrf.mxu0
    %1557 = vdwg.mxu0
    %1558 = vmatpush.bf16.msra.mxu0 %v328
    %1559 = vmatpush.bf16.msra.mxu0 %v324
    %1560 = vmatpush.bf16.msra.mxu0 %v320
    %1561 = vmatpush.bf16.msra.mxu0 %v316
    %1562 = vmatpush.bf16.msra.mxu0 %v312
    %1563 = vmatpush.bf16.msra.mxu0 %v308
    %1564 = vmatpush.bf16.msra.mxu0 %v304
    %1565 = vmatpush.bf16.msra.mxu0 %v300
    %1566 = vmatmul.bf16.gmra.mxu0 %v1478
    %v1567 = vpop.f32.mrf.mxu0
    %v1568 = vadd.f32 %v100, %v1567
    %v1569 = vpop.f32.mrf.mxu0
    %1570 = vdwg.mxu0
    %1571 = vmatpush.bf16.msra.mxu0 %v360
    %1572 = vmatpush.bf16.msra.mxu0 %v356
    %1573 = vmatpush.bf16.msra.mxu0 %v352
    %1574 = vmatpush.bf16.msra.mxu0 %v348
    %1575 = vmatpush.bf16.msra.mxu0 %v344
    %1576 = vmatpush.bf16.msra.mxu0 %v340
    %1577 = vmatpush.bf16.msra.mxu0 %v336
    %1578 = vmatpush.bf16.msra.mxu0 %v332
    %1579 = vmatmul.bf16.gmra.mxu0 %v1479
    %v1580 = vpop.f32.mrf.mxu0
    %v1581 = vadd.f32 %v1568, %v1580
    %v1582 = vpop.f32.mrf.mxu0
    %1583 = vdwg.mxu0
    %v1584 = vxor.u32 %v1503, 2147483648
    %v1585 = vxor.u32 %v1529, 2147483648
    %v1586 = vxor.u32 %v1555, 2147483648
    %v1587 = vmul.f32 %v1584, 1.442695
    %v1588 = vpow.pop %v1587
    %v1589 = vmul.f32 %v1585, 1.442695
    %v1590 = vpow.pop %v1589
    %v1591 = vmul.f32 %v1586, 1.442695
    %v1592 = vpow.pop %v1591
    %v1593 = vadd.f32 %v1588, 1.0
    %v1594 = vadd.f32 %v1590, 1.0
    %v1595 = vadd.f32 %v1592, 1.0
    %v1596 = vrcp.pop %v1593
    %v1597 = vmul.f32 %v1593, %v1596
    %v1598 = vsub.f32 1.0, %v1597
    %v1599 = vmul.f32 %v1596, %v1598
    %v1600 = vadd.f32 %v1596, %v1599
    %vm1601 = vweird.f32 %v1593
    %vm1602 = vweird.f32 %v1596
    %vm1603 = vmor %vm1601, %vm1602
    %v1604 = vsel %vm1603, %v1596, %v1600
    %v1605 = vand.u32 2147483647, %v1593
    %vm1606 = vcmp.eq.f32.partialorder %v1605, 8.507059e+37
    %v1607 = vand.u32 %v1593, 2147483648
    %v1608 = vor.u32 1.1754944e-38, %v1607
    %v1609 = vsel %vm1606, %v1608, %v1604
    %v1610 = vmul.f32 1.0, %v1609
    %v1611 = vrcp.pop %v1594
    %v1612 = vmul.f32 %v1594, %v1611
    %v1613 = vsub.f32 1.0, %v1612
    %v1614 = vmul.f32 %v1611, %v1613
    %v1615 = vadd.f32 %v1611, %v1614
    %vm1616 = vweird.f32 %v1594
    %vm1617 = vweird.f32 %v1611
    %vm1618 = vmor %vm1616, %vm1617
    %v1619 = vsel %vm1618, %v1611, %v1615
    %v1620 = vand.u32 2147483647, %v1594
    %vm1621 = vcmp.eq.f32.partialorder %v1620, 8.507059e+37
    %v1622 = vand.u32 %v1594, 2147483648
    %v1623 = vor.u32 1.1754944e-38, %v1622
    %v1624 = vsel %vm1621, %v1623, %v1619
    %v1625 = vmul.f32 1.0, %v1624
    %v1626 = vrcp.pop %v1595
    %v1627 = vmul.f32 %v1595, %v1626
    %v1628 = vsub.f32 1.0, %v1627
    %v1629 = vmul.f32 %v1626, %v1628
    %v1630 = vadd.f32 %v1626, %v1629
    %vm1631 = vweird.f32 %v1595
    %vm1632 = vweird.f32 %v1626
    %vm1633 = vmor %vm1631, %vm1632
    %v1634 = vsel %vm1633, %v1626, %v1630
    %v1635 = vand.u32 2147483647, %v1595
    %vm1636 = vcmp.eq.f32.partialorder %v1635, 8.507059e+37
    %v1637 = vand.u32 %v1595, 2147483648
    %v1638 = vor.u32 1.1754944e-38, %v1637
    %v1639 = vsel %vm1636, %v1638, %v1634
    %v1640 = vmul.f32 1.0, %v1639
    %v1641 = vtanh.pop %v1581
    %v1642 = vmul.f32 %v1625, %v1476
    %v1643 = vmul.f32 %v1610, %v1641
    %v1644 = vadd.f32 %v1642, %v1643
    %v1645 = vtanh.pop %v1644
    %v1646 = vmul.f32 %v1640, %v1645
    %1647 = vst [vmem:[#allocation3] sm:$0xff] %v1644
    %1648 = vst [vmem:[#allocation2] sm:$0xff] %v1646
    %s1649 = scalar_lea.vmem [#allocation4], 48
    %1650 = vst [vmem:[%s1649] sm:$0xff] %v1646
    %v1651 = vld [vmem:[#allocation2] sm:$0xff]
    %v1652 = vld [vmem:[#allocation3] sm:$0xff]
    %s1653 = scalar_lea.vmem %s0, 28
    %v1654 = vld [vmem:[%s1653] sm:$0xf]
    %v1655 = vpack.c.bf16 %v1651, %v1651
    %1656 = vmatpush.bf16.msra.mxu0 %v325
    %1657 = vmatpush.bf16.msra.mxu0 %v321
    %1658 = vmatpush.bf16.msra.mxu0 %v317
    %1659 = vmatpush.bf16.msra.mxu0 %v313
    %1660 = vmatpush.bf16.msra.mxu0 %v309
    %1661 = vmatpush.bf16.msra.mxu0 %v305
    %1662 = vmatpush.bf16.msra.mxu0 %v301
    %1663 = vmatpush.bf16.msra.mxu0 %v297
    %1664 = vmatmul.bf16.gmra.mxu0 %v1654
    %v1665 = vpop.f32.mrf.mxu0
    %v1666 = vadd.f32 %v97, %v1665
    %v1667 = vpop.f32.mrf.mxu0
    %1668 = vdwg.mxu0
    %1669 = vmatpush.bf16.msra.mxu0 %v357
    %1670 = vmatpush.bf16.msra.mxu0 %v353
    %1671 = vmatpush.bf16.msra.mxu0 %v349
    %1672 = vmatpush.bf16.msra.mxu0 %v345
    %1673 = vmatpush.bf16.msra.mxu0 %v341
    %1674 = vmatpush.bf16.msra.mxu0 %v337
    %1675 = vmatpush.bf16.msra.mxu0 %v333
    %1676 = vmatpush.bf16.msra.mxu0 %v329
    %1677 = vmatmul.bf16.gmra.mxu0 %v1655
    %v1678 = vpop.f32.mrf.mxu0
    %v1679 = vadd.f32 %v1666, %v1678
    %v1680 = vpop.f32.mrf.mxu0
    %1681 = vdwg.mxu0
    %1682 = vmatpush.bf16.msra.mxu0 %v326
    %1683 = vmatpush.bf16.msra.mxu0 %v322
    %1684 = vmatpush.bf16.msra.mxu0 %v318
    %1685 = vmatpush.bf16.msra.mxu0 %v314
    %1686 = vmatpush.bf16.msra.mxu0 %v310
    %1687 = vmatpush.bf16.msra.mxu0 %v306
    %1688 = vmatpush.bf16.msra.mxu0 %v302
    %1689 = vmatpush.bf16.msra.mxu0 %v298
    %1690 = vmatmul.bf16.gmra.mxu0 %v1654
    %v1691 = vpop.f32.mrf.mxu0
    %v1692 = vadd.f32 %v98, %v1691
    %v1693 = vpop.f32.mrf.mxu0
    %1694 = vdwg.mxu0
    %1695 = vmatpush.bf16.msra.mxu0 %v358
    %1696 = vmatpush.bf16.msra.mxu0 %v354
    %1697 = vmatpush.bf16.msra.mxu0 %v350
    %1698 = vmatpush.bf16.msra.mxu0 %v346
    %1699 = vmatpush.bf16.msra.mxu0 %v342
    %1700 = vmatpush.bf16.msra.mxu0 %v338
    %1701 = vmatpush.bf16.msra.mxu0 %v334
    %1702 = vmatpush.bf16.msra.mxu0 %v330
    %1703 = vmatmul.bf16.gmra.mxu0 %v1655
    %v1704 = vpop.f32.mrf.mxu0
    %v1705 = vadd.f32 %v1692, %v1704
    %v1706 = vpop.f32.mrf.mxu0
    %1707 = vdwg.mxu0
    %1708 = vmatpush.bf16.msra.mxu0 %v327
    %1709 = vmatpush.bf16.msra.mxu0 %v323
    %1710 = vmatpush.bf16.msra.mxu0 %v319
    %1711 = vmatpush.bf16.msra.mxu0 %v315
    %1712 = vmatpush.bf16.msra.mxu0 %v311
    %1713 = vmatpush.bf16.msra.mxu0 %v307
    %1714 = vmatpush.bf16.msra.mxu0 %v303
    %1715 = vmatpush.bf16.msra.mxu0 %v299
    %1716 = vmatmul.bf16.gmra.mxu0 %v1654
    %v1717 = vpop.f32.mrf.mxu0
    %v1718 = vadd.f32 %v99, %v1717
    %v1719 = vpop.f32.mrf.mxu0
    %1720 = vdwg.mxu0
    %1721 = vmatpush.bf16.msra.mxu0 %v359
    %1722 = vmatpush.bf16.msra.mxu0 %v355
    %1723 = vmatpush.bf16.msra.mxu0 %v351
    %1724 = vmatpush.bf16.msra.mxu0 %v347
    %1725 = vmatpush.bf16.msra.mxu0 %v343
    %1726 = vmatpush.bf16.msra.mxu0 %v339
    %1727 = vmatpush.bf16.msra.mxu0 %v335
    %1728 = vmatpush.bf16.msra.mxu0 %v331
    %1729 = vmatmul.bf16.gmra.mxu0 %v1655
    %v1730 = vpop.f32.mrf.mxu0
    %v1731 = vadd.f32 %v1718, %v1730
    %v1732 = vpop.f32.mrf.mxu0
    %1733 = vdwg.mxu0
    %1734 = vmatpush.bf16.msra.mxu0 %v328
    %1735 = vmatpush.bf16.msra.mxu0 %v324
    %1736 = vmatpush.bf16.msra.mxu0 %v320
    %1737 = vmatpush.bf16.msra.mxu0 %v316
    %1738 = vmatpush.bf16.msra.mxu0 %v312
    %1739 = vmatpush.bf16.msra.mxu0 %v308
    %1740 = vmatpush.bf16.msra.mxu0 %v304
    %1741 = vmatpush.bf16.msra.mxu0 %v300
    %1742 = vmatmul.bf16.gmra.mxu0 %v1654
    %v1743 = vpop.f32.mrf.mxu0
    %v1744 = vadd.f32 %v100, %v1743
    %v1745 = vpop.f32.mrf.mxu0
    %1746 = vdwg.mxu0
    %1747 = vmatpush.bf16.msra.mxu0 %v360
    %1748 = vmatpush.bf16.msra.mxu0 %v356
    %1749 = vmatpush.bf16.msra.mxu0 %v352
    %1750 = vmatpush.bf16.msra.mxu0 %v348
    %1751 = vmatpush.bf16.msra.mxu0 %v344
    %1752 = vmatpush.bf16.msra.mxu0 %v340
    %1753 = vmatpush.bf16.msra.mxu0 %v336
    %1754 = vmatpush.bf16.msra.mxu0 %v332
    %1755 = vmatmul.bf16.gmra.mxu0 %v1655
    %v1756 = vpop.f32.mrf.mxu0
    %v1757 = vadd.f32 %v1744, %v1756
    %v1758 = vpop.f32.mrf.mxu0
    %1759 = vdwg.mxu0
    %v1760 = vxor.u32 %v1679, 2147483648
    %v1761 = vxor.u32 %v1705, 2147483648
    %v1762 = vxor.u32 %v1731, 2147483648
    %v1763 = vmul.f32 %v1760, 1.442695
    %v1764 = vpow.pop %v1763
    %v1765 = vmul.f32 %v1761, 1.442695
    %v1766 = vpow.pop %v1765
    %v1767 = vmul.f32 %v1762, 1.442695
    %v1768 = vpow.pop %v1767
    %v1769 = vadd.f32 %v1764, 1.0
    %v1770 = vadd.f32 %v1766, 1.0
    %v1771 = vadd.f32 %v1768, 1.0
    %v1772 = vrcp.pop %v1769
    %v1773 = vmul.f32 %v1769, %v1772
    %v1774 = vsub.f32 1.0, %v1773
    %v1775 = vmul.f32 %v1772, %v1774
    %v1776 = vadd.f32 %v1772, %v1775
    %vm1777 = vweird.f32 %v1769
    %vm1778 = vweird.f32 %v1772
    %vm1779 = vmor %vm1777, %vm1778
    %v1780 = vsel %vm1779, %v1772, %v1776
    %v1781 = vand.u32 2147483647, %v1769
    %vm1782 = vcmp.eq.f32.partialorder %v1781, 8.507059e+37
    %v1783 = vand.u32 %v1769, 2147483648
    %v1784 = vor.u32 1.1754944e-38, %v1783
    %v1785 = vsel %vm1782, %v1784, %v1780
    %v1786 = vmul.f32 1.0, %v1785
    %v1787 = vrcp.pop %v1770
    %v1788 = vmul.f32 %v1770, %v1787
    %v1789 = vsub.f32 1.0, %v1788
    %v1790 = vmul.f32 %v1787, %v1789
    %v1791 = vadd.f32 %v1787, %v1790
    %vm1792 = vweird.f32 %v1770
    %vm1793 = vweird.f32 %v1787
    %vm1794 = vmor %vm1792, %vm1793
    %v1795 = vsel %vm1794, %v1787, %v1791
    %v1796 = vand.u32 2147483647, %v1770
    %vm1797 = vcmp.eq.f32.partialorder %v1796, 8.507059e+37
    %v1798 = vand.u32 %v1770, 2147483648
    %v1799 = vor.u32 1.1754944e-38, %v1798
    %v1800 = vsel %vm1797, %v1799, %v1795
    %v1801 = vmul.f32 1.0, %v1800
    %v1802 = vrcp.pop %v1771
    %v1803 = vmul.f32 %v1771, %v1802
    %v1804 = vsub.f32 1.0, %v1803
    %v1805 = vmul.f32 %v1802, %v1804
    %v1806 = vadd.f32 %v1802, %v1805
    %vm1807 = vweird.f32 %v1771
    %vm1808 = vweird.f32 %v1802
    %vm1809 = vmor %vm1807, %vm1808
    %v1810 = vsel %vm1809, %v1802, %v1806
    %v1811 = vand.u32 2147483647, %v1771
    %vm1812 = vcmp.eq.f32.partialorder %v1811, 8.507059e+37
    %v1813 = vand.u32 %v1771, 2147483648
    %v1814 = vor.u32 1.1754944e-38, %v1813
    %v1815 = vsel %vm1812, %v1814, %v1810
    %v1816 = vmul.f32 1.0, %v1815
    %v1817 = vtanh.pop %v1757
    %v1818 = vmul.f32 %v1801, %v1652
    %v1819 = vmul.f32 %v1786, %v1817
    %v1820 = vadd.f32 %v1818, %v1819
    %v1821 = vtanh.pop %v1820
    %v1822 = vmul.f32 %v1816, %v1821
    %1823 = vst [vmem:[#allocation3] sm:$0xff] %v1820
    %1824 = vst [vmem:[#allocation2] sm:$0xff] %v1822
    %s1825 = scalar_lea.vmem [#allocation4], 56
    %1826 = vst [vmem:[%s1825] sm:$0xff] %v1822
    %v1827 = vld [vmem:[#allocation4] sm:$0xff]
    %v1828 = vld [vmem:[#allocation4 + $0x8] sm:$0xff]
    %v1829 = vld [vmem:[#allocation4 + $0x10] sm:$0xff]
    %v1830 = vld [vmem:[#allocation4 + $0x18] sm:$0xff]
    %v1831 = vld [vmem:[#allocation4 + $0x20] sm:$0xff]
    %v1832 = vld [vmem:[#allocation4 + $0x28] sm:$0xff]
    %v1833 = vld [vmem:[#allocation4 + $0x30] sm:$0xff]
    %v1834 = vld [vmem:[#allocation4 + $0x38] sm:$0xff]
    %v1835 = vld [vmem:[%s0] sm:$0xf]
    %v1836 = vld [vmem:[%s0 + $0x4] sm:$0xf]
    %v1837 = vld [vmem:[%s0 + $0x8] sm:$0xf]
    %v1838 = vld [vmem:[%s0 + $0xc] sm:$0xf]
    %v1839 = vld [vmem:[%s0 + $0x10] sm:$0xf]
    %v1840 = vld [vmem:[%s0 + $0x14] sm:$0xf]
    %v1841 = vld [vmem:[%s0 + $0x18] sm:$0xf]
    %v1842 = vld [vmem:[%s0 + $0x1c] sm:$0xf]
    %v1843 = vunpack.c.l.bf16 %v1835
    %v1844 = vunpack.c.l.bf16 %v1836
    %v1845 = vunpack.c.l.bf16 %v1837
    %v1846 = vunpack.c.l.bf16 %v1838
    %v1847 = vunpack.c.l.bf16 %v1839
    %v1848 = vunpack.c.l.bf16 %v1840
    %v1849 = vunpack.c.l.bf16 %v1841
    %v1850 = vunpack.c.l.bf16 %v1842
    %v1851 = vadd.f32 %v1827, %v1843
    %v1852 = vadd.f32 %v1828, %v1844
    %v1853 = vadd.f32 %v1829, %v1845
    %v1854 = vadd.f32 %v1830, %v1846
    %v1855 = vadd.f32 %v1831, %v1847
    %v1856 = vadd.f32 %v1832, %v1848
    %v1857 = vadd.f32 %v1833, %v1849
    %v1858 = vadd.f32 %v1834, %v1850
    %1859 = vadd.xlane.f32.xlu0 %v1851
    %v1860 = vpop.xlane.xlu0 %1859
    %1861 = vadd.xlane.f32.xlu0 %v1852
    %v1862 = vpop.xlane.xlu0 %1861
    %1863 = vadd.xlane.f32.xlu0 %v1853
    %v1864 = vpop.xlane.xlu0 %1863
    %1865 = vadd.xlane.f32.xlu0 %v1854
    %v1866 = vpop.xlane.xlu0 %1865
    %1867 = vadd.xlane.f32.xlu0 %v1855
    %v1868 = vpop.xlane.xlu0 %1867
    %1869 = vadd.xlane.f32.xlu0 %v1856
    %v1870 = vpop.xlane.xlu0 %1869
    %1871 = vadd.xlane.f32.xlu0 %v1857
    %v1872 = vpop.xlane.xlu0 %1871
    %1873 = vadd.xlane.f32.xlu0 %v1858
    %v1874 = vpop.xlane.xlu0 %1873
    %v1875 = vrcp.pop 128.0
    %v1876 = vmul.f32 128.0, %v1875
    %v1877 = vsub.f32 1.0, %v1876
    %v1878 = vmul.f32 %v1875, %v1877
    %v1879 = vadd.f32 %v1875, %v1878
    %vm1880 = vweird.f32 %v1875
    %v1881 = vsel %vm1880, %v1875, %v1879
    %v1882 = vmul.f32 %v1860, %v1881
    %v1883 = vmul.f32 %v1862, %v1881
    %v1884 = vmul.f32 %v1864, %v1881
    %v1885 = vmul.f32 %v1866, %v1881
    %v1886 = vmul.f32 %v1868, %v1881
    %v1887 = vmul.f32 %v1870, %v1881
    %v1888 = vmul.f32 %v1872, %v1881
    %v1889 = vmul.f32 %v1874, %v1881
    %v1890 = vsub.f32 %v1851, %v1882
    %v1891 = vsub.f32 %v1852, %v1883
    %v1892 = vsub.f32 %v1853, %v1884
    %v1893 = vsub.f32 %v1854, %v1885
    %v1894 = vsub.f32 %v1855, %v1886
    %v1895 = vsub.f32 %v1856, %v1887
    %v1896 = vsub.f32 %v1857, %v1888
    %v1897 = vsub.f32 %v1858, %v1889
    %v1898 = vmul.f32 %v1890, %v1890
    %v1899 = vmul.f32 %v1891, %v1891
    %v1900 = vmul.f32 %v1892, %v1892
    %v1901 = vmul.f32 %v1893, %v1893
    %v1902 = vmul.f32 %v1894, %v1894
    %v1903 = vmul.f32 %v1895, %v1895
    %v1904 = vmul.f32 %v1896, %v1896
    %v1905 = vmul.f32 %v1897, %v1897
    %1906 = vadd.xlane.f32.xlu0 %v1898
    %v1907 = vpop.xlane.xlu0 %1906
    %1908 = vadd.xlane.f32.xlu0 %v1899
    %v1909 = vpop.xlane.xlu0 %1908
    %1910 = vadd.xlane.f32.xlu0 %v1900
    %v1911 = vpop.xlane.xlu0 %1910
    %1912 = vadd.xlane.f32.xlu0 %v1901
    %v1913 = vpop.xlane.xlu0 %1912
    %1914 = vadd.xlane.f32.xlu0 %v1902
    %v1915 = vpop.xlane.xlu0 %1914
    %1916 = vadd.xlane.f32.xlu0 %v1903
    %v1917 = vpop.xlane.xlu0 %1916
    %1918 = vadd.xlane.f32.xlu0 %v1904
    %v1919 = vpop.xlane.xlu0 %1918
    %1920 = vadd.xlane.f32.xlu0 %v1905
    %v1921 = vpop.xlane.xlu0 %1920
    %v1922 = vmul.f32 %v1907, %v1881
    %v1923 = vmul.f32 %v1909, %v1881
    %v1924 = vmul.f32 %v1911, %v1881
    %v1925 = vmul.f32 %v1913, %v1881
    %v1926 = vmul.f32 %v1915, %v1881
    %v1927 = vmul.f32 %v1917, %v1881
    %v1928 = vmul.f32 %v1919, %v1881
    %v1929 = vmul.f32 %v1921, %v1881
    %v1930 = vadd.f32 %v1922, 1e-05
    %v1931 = vadd.f32 %v1923, 1e-05
    %v1932 = vadd.f32 %v1924, 1e-05
    %v1933 = vadd.f32 %v1925, 1e-05
    %v1934 = vadd.f32 %v1926, 1e-05
    %v1935 = vadd.f32 %v1927, 1e-05
    %v1936 = vadd.f32 %v1928, 1e-05
    %v1937 = vadd.f32 %v1929, 1e-05
    %v1938 = vrsqrt.pop %v1930
    %v1939 = vmul.f32 %v1938, %v1930
    %v1940 = vmul.f32 %v1939, %v1938
    %v1941 = vmul.f32 0.5, %v1940
    %v1942 = vsub.f32 1.5, %v1941
    %v1943 = vmul.f32 %v1938, %v1942
    %vm1944 = vweird.f32 %v1930
    %vm1945 = vweird.f32 %v1938
    %vm1946 = vmor %vm1944, %vm1945
    %v1947 = vsel %vm1946, %v1938, %v1943
    %v1948 = vrsqrt.pop %v1931
    %v1949 = vmul.f32 %v1948, %v1931
    %v1950 = vmul.f32 %v1949, %v1948
    %v1951 = vmul.f32 0.5, %v1950
    %v1952 = vsub.f32 1.5, %v1951
    %v1953 = vmul.f32 %v1948, %v1952
    %vm1954 = vweird.f32 %v1931
    %vm1955 = vweird.f32 %v1948
    %vm1956 = vmor %vm1954, %vm1955
    %v1957 = vsel %vm1956, %v1948, %v1953
    %v1958 = vrsqrt.pop %v1932
    %v1959 = vmul.f32 %v1958, %v1932
    %v1960 = vmul.f32 %v1959, %v1958
    %v1961 = vmul.f32 0.5, %v1960
    %v1962 = vsub.f32 1.5, %v1961
    %v1963 = vmul.f32 %v1958, %v1962
    %vm1964 = vweird.f32 %v1932
    %vm1965 = vweird.f32 %v1958
    %vm1966 = vmor %vm1964, %vm1965
    %v1967 = vsel %vm1966, %v1958, %v1963
    %v1968 = vrsqrt.pop %v1933
    %v1969 = vmul.f32 %v1968, %v1933
    %v1970 = vmul.f32 %v1969, %v1968
    %v1971 = vmul.f32 0.5, %v1970
    %v1972 = vsub.f32 1.5, %v1971
    %v1973 = vmul.f32 %v1968, %v1972
    %vm1974 = vweird.f32 %v1933
    %vm1975 = vweird.f32 %v1968
    %vm1976 = vmor %vm1974, %vm1975
    %v1977 = vsel %vm1976, %v1968, %v1973
    %v1978 = vrsqrt.pop %v1934
    %v1979 = vmul.f32 %v1978, %v1934
    %v1980 = vmul.f32 %v1979, %v1978
    %v1981 = vmul.f32 0.5, %v1980
    %v1982 = vsub.f32 1.5, %v1981
    %v1983 = vmul.f32 %v1978, %v1982
    %vm1984 = vweird.f32 %v1934
    %vm1985 = vweird.f32 %v1978
    %vm1986 = vmor %vm1984, %vm1985
    %v1987 = vsel %vm1986, %v1978, %v1983
    %v1988 = vrsqrt.pop %v1935
    %v1989 = vmul.f32 %v1988, %v1935
    %v1990 = vmul.f32 %v1989, %v1988
    %v1991 = vmul.f32 0.5, %v1990
    %v1992 = vsub.f32 1.5, %v1991
    %v1993 = vmul.f32 %v1988, %v1992
    %vm1994 = vweird.f32 %v1935
    %vm1995 = vweird.f32 %v1988
    %vm1996 = vmor %vm1994, %vm1995
    %v1997 = vsel %vm1996, %v1988, %v1993
    %v1998 = vrsqrt.pop %v1936
    %v1999 = vmul.f32 %v1998, %v1936
    %v2000 = vmul.f32 %v1999, %v1998
    %v2001 = vmul.f32 0.5, %v2000
    %v2002 = vsub.f32 1.5, %v2001
    %v2003 = vmul.f32 %v1998, %v2002
    %vm2004 = vweird.f32 %v1936
    %vm2005 = vweird.f32 %v1998
    %vm2006 = vmor %vm2004, %vm2005
    %v2007 = vsel %vm2006, %v1998, %v2003
    %v2008 = vrsqrt.pop %v1937
    %v2009 = vmul.f32 %v2008, %v1937
    %v2010 = vmul.f32 %v2009, %v2008
    %v2011 = vmul.f32 0.5, %v2010
    %v2012 = vsub.f32 1.5, %v2011
    %v2013 = vmul.f32 %v2008, %v2012
    %vm2014 = vweird.f32 %v1937
    %vm2015 = vweird.f32 %v2008
    %vm2016 = vmor %vm2014, %vm2015
    %v2017 = vsel %vm2016, %v2008, %v2013
    %v2018 = vmul.f32 %v1890, %v1947
    %v2019 = vmul.f32 %v1891, %v1957
    %v2020 = vmul.f32 %v1892, %v1967
    %v2021 = vmul.f32 %v1893, %v1977
    %v2022 = vmul.f32 %v1894, %v1987
    %v2023 = vmul.f32 %v1895, %v1997
    %v2024 = vmul.f32 %v1896, %v2007
    %v2025 = vmul.f32 %v1897, %v2017
    %v2026 = vld [vmem:[%s3] sm:$0x1]
    %v2028 = vperm.slane %v2026, 0
    %v2030 = vmul.f32 %v2018, %v2028
    %v2031 = vmul.f32 %v2019, %v2028
    %v2032 = vmul.f32 %v2020, %v2028
    %v2033 = vmul.f32 %v2021, %v2028
    %v2034 = vmul.f32 %v2022, %v2028
    %v2035 = vmul.f32 %v2023, %v2028
    %v2036 = vmul.f32 %v2024, %v2028
    %v2037 = vmul.f32 %v2025, %v2028
    %v2038 = vld [vmem:[%s4] sm:$0x1]
    %v2040 = vperm.slane %v2038, 0
    %v2042 = vadd.f32 %v2030, %v2040
    %v2043 = vadd.f32 %v2031, %v2040
    %v2044 = vadd.f32 %v2032, %v2040
    %v2045 = vadd.f32 %v2033, %v2040
    %v2046 = vadd.f32 %v2034, %v2040
    %v2047 = vadd.f32 %v2035, %v2040
    %v2048 = vadd.f32 %v2036, %v2040
    %v2049 = vadd.f32 %v2037, %v2040
    %v2050 = vpack.c.bf16 %v2042, %v2042
    %v2051 = vpack.c.bf16 %v2043, %v2043
    %v2052 = vpack.c.bf16 %v2044, %v2044
    %v2053 = vpack.c.bf16 %v2045, %v2045
    %v2054 = vpack.c.bf16 %v2046, %v2046
    %v2055 = vpack.c.bf16 %v2047, %v2047
    %v2056 = vpack.c.bf16 %v2048, %v2048
    %v2057 = vpack.c.bf16 %v2049, %v2049
    %2058 = vst [vmem:[#allocation5] sm:$0xf] %v2050
    %2059 = vst [vmem:[#allocation5 + $0x4] sm:$0xf] %v2051
    %2060 = vst [vmem:[#allocation5 + $0x8] sm:$0xf] %v2052
    %2061 = vst [vmem:[#allocation5 + $0xc] sm:$0xf] %v2053
    %2062 = vst [vmem:[#allocation5 + $0x10] sm:$0xf] %v2054
    %2063 = vst [vmem:[#allocation5 + $0x14] sm:$0xf] %v2055
    %2064 = vst [vmem:[#allocation5 + $0x18] sm:$0xf] %v2056
    %2065 = vst [vmem:[#allocation5 + $0x1c] sm:$0xf] %v2057
    // Predicated region
    $region26: #{_plstm_forward.1} parent=1 // pred_check
      _
    $region27: #{_plstm_forward.1} parent=1 // pred_check_branch
      %2067 = sbr.rel (0) target = $region29
    $region28: #{_plstm_forward.1} parent=1 // pred_region
      %2069 = vsyncadd [#allocation6], 0
      %s2070 = sshll.u32 [#allocation5], 4
      %s2071 = int_to_ptr.vmem [resolvable:$true] %s2070
      %s2072 = sshll.u32 %s5, 4
      %s2073 = int_to_ptr.hbm [resolvable:$true] %s2072
      %2078 = dma.vmem_to_hbm [thread:$0]  %s2071, 512, %s2073, [#allocation6], 64, 64, 4
    $region29: #{_plstm_forward.1} parent=1 // pred_fallthru
      _
    // Predicated region
    $region30: #{_plstm_forward.1} parent=1 // pred_check
      _
    $region31: #{_plstm_forward.1} parent=1 // pred_check_branch
      %2080 = sbr.rel (0) target = $region33
    $region32: #{_plstm_forward.1} parent=1 // pred_region
      %2082 = dma.done [#allocation6], 512
    $region33: #{_plstm_forward.1} parent=1 // pred_fallthru
      _
    %2083 = vsyncpa [#allocation6], 1

</llo_original>
